<compile_context>
chip_gen: v7x
topology: tpu7x:2x2x1
jax: 0.10.0
libtpu: 0.0.40
codegen_flags: <defaults>
</compile_context>

<pallas_src>
import functools
import math

import jax
import jax.numpy as jnp
from jax.experimental import pallas as pl
from jax.experimental.pallas import tpu as pltpu


_DN_XWT = (((1,), (1,)), ((), ()))  # contract dim 1 of both operands: x @ W^T


def _mha_fused_kernel(q_ref, k_ref, v_ref,
                      wq_ref, bq_ref, wk_ref, bk_ref, wv_ref, bv_ref,
                      wc_ref, bc_ref, o_ref, *, n_head):
    f32 = jnp.float32

    # ---- Q/K/V projections: one MXU dot each, weights kept as (out, in). ----
    Q = jax.lax.dot_general(q_ref[...], wq_ref[...], _DN_XWT,
                            preferred_element_type=f32) + bq_ref[...]
    K = jax.lax.dot_general(k_ref[...], wk_ref[...], _DN_XWT,
                            preferred_element_type=f32) + bk_ref[...]
    V = jax.lax.dot_general(v_ref[...], wv_ref[...], _DN_XWT,
                            preferred_element_type=f32) + bv_ref[...]

    L, hid = Q.shape
    D = hid // n_head
    # Fold the 1/sqrt(n_head) score scale into Q (smaller operand than score).
    Q = Q * (1.0 / math.sqrt(n_head))

    # Lane-index map used to scatter results into the concat() layout without
    # any stores (purely elementwise select + add on one vreg-sized tile).
    lane = jax.lax.broadcasted_iota(jnp.int32, (L, hid), 1)
    attn = jnp.zeros((L, hid), dtype=f32)

    # ---- attention; split() realized with static lane slices so everything
    #      stays lane-dense:  Qs[l, d, h] == Q[l, h*D + d].  For each query
    #      index d build score[:, d, :] (shape (L, D)), softmax over the last
    #      axis, contract with V per head, and accumulate the result into the
    #      concat() layout column h*D + d. ----
    for d in range(D):
        s = None
        for h in range(n_head):
            qcol = Q[:, h * D + d:h * D + d + 1]        # (L, 1)  = Qs[:, d, h]
            kblk = K[:, h * D:(h + 1) * D]              # (L, D)  = Ks[:, :, h]
            term = qcol * kblk
            s = term if s is None else s + term         # (L, D) = score[:, d, :]
        s = s - jnp.max(s, axis=-1, keepdims=True)
        p = jnp.exp(s)
        p = p * pl.reciprocal(jnp.sum(p, axis=-1, keepdims=True), approx=True)
        for h in range(n_head):
            vblk = V[:, h * D:(h + 1) * D]              # (L, D)  = Vs[:, :, h]
            ocol = jnp.sum(p * vblk, axis=-1, keepdims=True)   # (L, 1) = out[:, d, h]
            attn = attn + jnp.where(lane == (h * D + d), ocol, 0.0)

    # ---- output projection (w_concat), again weights as (out, in). ----
    o_ref[...] = jax.lax.dot_general(attn, wc_ref[...], _DN_XWT,
                                     preferred_element_type=f32) + bc_ref[...]


def multi_head_attention(q, k, v, params, n_head):
    """q/k/v: (L, in_channels); params in PyTorch nn.Linear (out, in) layout."""
    L, _ = q.shape
    hid = params["wq"].shape[0]

    def full_spec(shape):
        return pl.BlockSpec(shape, lambda i, _s=shape: (0,) * len(_s))

    in_specs = [
        full_spec(q.shape), full_spec(k.shape), full_spec(v.shape),
        full_spec(params["wq"].shape), full_spec((1, hid)),
        full_spec(params["wk"].shape), full_spec((1, hid)),
        full_spec(params["wv"].shape), full_spec((1, hid)),
        full_spec(params["wc"].shape), full_spec((1, hid)),
    ]
    return pl.pallas_call(
        functools.partial(_mha_fused_kernel, n_head=n_head),
        out_shape=jax.ShapeDtypeStruct((L, hid), jnp.float32),
        grid=(1,),
        in_specs=in_specs,
        out_specs=full_spec((L, hid)),
        compiler_params=pltpu.CompilerParams(dimension_semantics=("arbitrary",)),
    )(q, k, v,
      params["wq"], params["bq"].reshape(1, hid),
      params["wk"], params["bk"].reshape(1, hid),
      params["wv"], params["bv"].reshape(1, hid),
      params["wc"], params["bc"].reshape(1, hid))


# ---------------- pure-JAX reference (for verification) ----------------
def reference_mha(q, k, v, params, n_head):
    def lin(x, w, b):
        return x @ w.T + b

    Q = lin(q, params["wq"], params["bq"])
    K = lin(k, params["wk"], params["bk"])
    V = lin(v, params["wv"], params["bv"])
    L, hid = Q.shape
    D = hid // n_head
    Qs = Q.reshape(L, n_head, D).transpose(0, 2, 1)   # (L, D, n_head)
    Ks = K.reshape(L, n_head, D).transpose(0, 2, 1)
    Vs = V.reshape(L, n_head, D).transpose(0, 2, 1)
    s = jnp.einsum("ldh,leh->lde", Qs, Ks) / math.sqrt(n_head)
    p = jax.nn.softmax(s, axis=-1)
    out = jnp.einsum("lde,leh->ldh", p, Vs)
    out = out.transpose(0, 2, 1).reshape(L, hid)      # concat()
    return lin(out, params["wc"], params["bc"])


if __name__ == "__main__":
    L = 8               # sequence length (rows of the 2-D q/k/v inputs)
    in_channels = 32
    hid_channels = 32
    n_head = 4

    key = jax.random.PRNGKey(0)
    keys = jax.random.split(key, 11)
    s_in = 1.0 / math.sqrt(in_channels)
    s_hid = 1.0 / math.sqrt(hid_channels)
    params = {
        "wq": jax.random.uniform(keys[0], (hid_channels, in_channels), jnp.float32, -s_in, s_in),
        "bq": jax.random.uniform(keys[1], (hid_channels,), jnp.float32, -s_in, s_in),
        "wk": jax.random.uniform(keys[2], (hid_channels, in_channels), jnp.float32, -s_in, s_in),
        "bk": jax.random.uniform(keys[3], (hid_channels,), jnp.float32, -s_in, s_in),
        "wv": jax.random.uniform(keys[4], (hid_channels, in_channels), jnp.float32, -s_in, s_in),
        "bv": jax.random.uniform(keys[5], (hid_channels,), jnp.float32, -s_in, s_in),
        "wc": jax.random.uniform(keys[6], (hid_channels, hid_channels), jnp.float32, -s_hid, s_hid),
        "bc": jax.random.uniform(keys[7], (hid_channels,), jnp.float32, -s_hid, s_hid),
    }
    q = jax.random.normal(keys[8], (L, in_channels), jnp.float32)
    k = jax.random.normal(keys[9], (L, in_channels), jnp.float32)
    v = jax.random.normal(keys[10], (L, in_channels), jnp.float32)

    mha = jax.jit(functools.partial(multi_head_attention, n_head=n_head))
    out = jax.block_until_ready(mha(q, k, v, params))

    ref = reference_mha(q, k, v, params, n_head)
    assert out.shape == (L, hid_channels)
    assert jnp.allclose(out, ref, atol=2e-2, rtol=2e-2), (
        f"max abs err {jnp.max(jnp.abs(out - ref))}"
    )
    print("KERNEL_OK")
</pallas_src>

<mosaic_0001>
module attributes {stable_mosaic.version = 11 : i64} {
  func.func @_mha_fused_kernel(%arg0: i32, %arg1: memref<8x32xf32, #tpu.memory_space<vmem>>, %arg2: memref<8x32xf32, #tpu.memory_space<vmem>>, %arg3: memref<8x32xf32, #tpu.memory_space<vmem>>, %arg4: memref<32x32xf32, #tpu.memory_space<vmem>>, %arg5: memref<1x32xf32, #tpu.memory_space<vmem>>, %arg6: memref<32x32xf32, #tpu.memory_space<vmem>>, %arg7: memref<1x32xf32, #tpu.memory_space<vmem>>, %arg8: memref<32x32xf32, #tpu.memory_space<vmem>>, %arg9: memref<1x32xf32, #tpu.memory_space<vmem>>, %arg10: memref<32x32xf32, #tpu.memory_space<vmem>>, %arg11: memref<1x32xf32, #tpu.memory_space<vmem>>, %arg12: memref<8x32xf32, #tpu.memory_space<vmem>>) attributes {dimension_semantics = [#tpu.dimension_semantics<arbitrary>], iteration_bounds = array<i64: 1>, scalar_prefetch = 0 : i64, scratch_operands = 0 : i64, tpu.core_type = #tpu.core_type<tc>, window_params = [{pipeline_mode = #tpu.pipeline_mode<synchronous>, transform_indices = @transform_0, window_bounds = array<i64: 8, 32>}, {pipeline_mode = #tpu.pipeline_mode<synchronous>, transform_indices = @transform_1, window_bounds = array<i64: 8, 32>}, {pipeline_mode = #tpu.pipeline_mode<synchronous>, transform_indices = @transform_2, window_bounds = array<i64: 8, 32>}, {pipeline_mode = #tpu.pipeline_mode<synchronous>, transform_indices = @transform_3, window_bounds = array<i64: 32, 32>}, {pipeline_mode = #tpu.pipeline_mode<synchronous>, transform_indices = @transform_4, window_bounds = array<i64: 1, 32>}, {pipeline_mode = #tpu.pipeline_mode<synchronous>, transform_indices = @transform_5, window_bounds = array<i64: 32, 32>}, {pipeline_mode = #tpu.pipeline_mode<synchronous>, transform_indices = @transform_6, window_bounds = array<i64: 1, 32>}, {pipeline_mode = #tpu.pipeline_mode<synchronous>, transform_indices = @transform_7, window_bounds = array<i64: 32, 32>}, {pipeline_mode = #tpu.pipeline_mode<synchronous>, transform_indices = @transform_8, window_bounds = array<i64: 1, 32>}, {pipeline_mode = #tpu.pipeline_mode<synchronous>, transform_indices = @transform_9, window_bounds = array<i64: 32, 32>}, {pipeline_mode = #tpu.pipeline_mode<synchronous>, transform_indices = @transform_10, window_bounds = array<i64: 1, 32>}, {pipeline_mode = #tpu.pipeline_mode<synchronous>, transform_indices = @transform_11, window_bounds = array<i64: 8, 32>}]} {
    %c0 = arith.constant 0 : index
    %c0_0 = arith.constant 0 : index
    %0 = vector.load %arg1[%c0, %c0_0] : memref<8x32xf32, #tpu.memory_space<vmem>>, vector<8x32xf32>
    %c0_1 = arith.constant 0 : index
    %c0_2 = arith.constant 0 : index
    %1 = vector.load %arg4[%c0_1, %c0_2] : memref<32x32xf32, #tpu.memory_space<vmem>>, vector<32x32xf32>
    %cst = arith.constant dense<0.000000e+00> : vector<8x32xf32>
    %2 = tpu.matmul %0, %1, %cst {dimension_numbers = #tpu.dot_dimension_numbers<[1], [1], [0], [0], [0, 0, 1, 0], [], []>} : vector<8x32xf32>, vector<32x32xf32>, vector<8x32xf32> -> vector<8x32xf32>
    %c0_3 = arith.constant 0 : index
    %c0_4 = arith.constant 0 : index
    %3 = vector.load %arg5[%c0_3, %c0_4] : memref<1x32xf32, #tpu.memory_space<vmem>>, vector<1x32xf32>
    %4 = vector.broadcast %3 : vector<1x32xf32> to vector<8x32xf32>
    %5 = arith.addf %2, %4 : vector<8x32xf32>
    %c0_5 = arith.constant 0 : index
    %c0_6 = arith.constant 0 : index
    %6 = vector.load %arg2[%c0_5, %c0_6] : memref<8x32xf32, #tpu.memory_space<vmem>>, vector<8x32xf32>
    %c0_7 = arith.constant 0 : index
    %c0_8 = arith.constant 0 : index
    %7 = vector.load %arg6[%c0_7, %c0_8] : memref<32x32xf32, #tpu.memory_space<vmem>>, vector<32x32xf32>
    %cst_9 = arith.constant dense<0.000000e+00> : vector<8x32xf32>
    %8 = tpu.matmul %6, %7, %cst_9 {dimension_numbers = #tpu.dot_dimension_numbers<[1], [1], [0], [0], [0, 0, 1, 0], [], []>} : vector<8x32xf32>, vector<32x32xf32>, vector<8x32xf32> -> vector<8x32xf32>
    %c0_10 = arith.constant 0 : index
    %c0_11 = arith.constant 0 : index
    %9 = vector.load %arg7[%c0_10, %c0_11] : memref<1x32xf32, #tpu.memory_space<vmem>>, vector<1x32xf32>
    %10 = vector.broadcast %9 : vector<1x32xf32> to vector<8x32xf32>
    %11 = arith.addf %8, %10 : vector<8x32xf32>
    %c0_12 = arith.constant 0 : index
    %c0_13 = arith.constant 0 : index
    %12 = vector.load %arg3[%c0_12, %c0_13] : memref<8x32xf32, #tpu.memory_space<vmem>>, vector<8x32xf32>
    %c0_14 = arith.constant 0 : index
    %c0_15 = arith.constant 0 : index
    %13 = vector.load %arg8[%c0_14, %c0_15] : memref<32x32xf32, #tpu.memory_space<vmem>>, vector<32x32xf32>
    %cst_16 = arith.constant dense<0.000000e+00> : vector<8x32xf32>
    %14 = tpu.matmul %12, %13, %cst_16 {dimension_numbers = #tpu.dot_dimension_numbers<[1], [1], [0], [0], [0, 0, 1, 0], [], []>} : vector<8x32xf32>, vector<32x32xf32>, vector<8x32xf32> -> vector<8x32xf32>
    %c0_17 = arith.constant 0 : index
    %c0_18 = arith.constant 0 : index
    %15 = vector.load %arg9[%c0_17, %c0_18] : memref<1x32xf32, #tpu.memory_space<vmem>>, vector<1x32xf32>
    %16 = vector.broadcast %15 : vector<1x32xf32> to vector<8x32xf32>
    %17 = arith.addf %14, %16 : vector<8x32xf32>
    %cst_19 = arith.constant 5.000000e-01 : f32
    %18 = vector.broadcast %cst_19 : f32 to vector<8x32xf32>
    %19 = arith.mulf %5, %18 : vector<8x32xf32>
    %20 = tpu.iota {dimensions = array<i32: 1>} : vector<8x32xi32>
    %cst_20 = arith.constant 0.000000e+00 : f32
    %21 = vector.broadcast %cst_20 : f32 to vector<8x32xf32>
    %22 = vector.extract_strided_slice %19 {offsets = [0, 0], sizes = [8, 1], strides = [1, 1]} : vector<8x32xf32> to vector<8x1xf32>
    %23 = vector.extract_strided_slice %11 {offsets = [0, 0], sizes = [8, 8], strides = [1, 1]} : vector<8x32xf32> to vector<8x8xf32>
    %24 = vector.broadcast %22 : vector<8x1xf32> to vector<8x8xf32>
    %25 = arith.mulf %24, %23 : vector<8x8xf32>
    %26 = vector.extract_strided_slice %19 {offsets = [0, 8], sizes = [8, 1], strides = [1, 1]} : vector<8x32xf32> to vector<8x1xf32>
    %27 = vector.extract_strided_slice %11 {offsets = [0, 8], sizes = [8, 8], strides = [1, 1]} : vector<8x32xf32> to vector<8x8xf32>
    %28 = vector.broadcast %26 : vector<8x1xf32> to vector<8x8xf32>
    %29 = arith.mulf %28, %27 : vector<8x8xf32>
    %30 = arith.addf %25, %29 : vector<8x8xf32>
    %31 = vector.extract_strided_slice %19 {offsets = [0, 16], sizes = [8, 1], strides = [1, 1]} : vector<8x32xf32> to vector<8x1xf32>
    %32 = vector.extract_strided_slice %11 {offsets = [0, 16], sizes = [8, 8], strides = [1, 1]} : vector<8x32xf32> to vector<8x8xf32>
    %33 = vector.broadcast %31 : vector<8x1xf32> to vector<8x8xf32>
    %34 = arith.mulf %33, %32 : vector<8x8xf32>
    %35 = arith.addf %30, %34 : vector<8x8xf32>
    %36 = vector.extract_strided_slice %19 {offsets = [0, 24], sizes = [8, 1], strides = [1, 1]} : vector<8x32xf32> to vector<8x1xf32>
    %37 = vector.extract_strided_slice %11 {offsets = [0, 24], sizes = [8, 8], strides = [1, 1]} : vector<8x32xf32> to vector<8x8xf32>
    %38 = vector.broadcast %36 : vector<8x1xf32> to vector<8x8xf32>
    %39 = arith.mulf %38, %37 : vector<8x8xf32>
    %40 = arith.addf %35, %39 : vector<8x8xf32>
    %cst_21 = arith.constant dense<0xFF800000> : vector<8xf32>
    %41 = vector.multi_reduction <maximumf>, %40, %cst_21 [1] : vector<8x8xf32> to vector<8xf32>
    %42 = vector.shape_cast %41 : vector<8xf32> to vector<8x1xf32>
    %43 = vector.broadcast %42 : vector<8x1xf32> to vector<8x8xf32>
    %44 = arith.subf %40, %43 : vector<8x8xf32>
    %45 = math.exp %44 : vector<8x8xf32>
    %cst_22 = arith.constant dense<0.000000e+00> : vector<8xf32>
    %46 = vector.multi_reduction <add>, %45, %cst_22 [1] : vector<8x8xf32> to vector<8xf32>
    %47 = vector.shape_cast %46 : vector<8xf32> to vector<8x1xf32>
    %48 = tpu.reciprocal %47 {approx = true} : vector<8x1xf32> -> vector<8x1xf32>
    %49 = vector.broadcast %48 : vector<8x1xf32> to vector<8x8xf32>
    %50 = arith.mulf %45, %49 : vector<8x8xf32>
    %51 = vector.extract_strided_slice %17 {offsets = [0, 0], sizes = [8, 8], strides = [1, 1]} : vector<8x32xf32> to vector<8x8xf32>
    %52 = arith.mulf %50, %51 : vector<8x8xf32>
    %cst_23 = arith.constant dense<0.000000e+00> : vector<8xf32>
    %53 = vector.multi_reduction <add>, %52, %cst_23 [1] : vector<8x8xf32> to vector<8xf32>
    %54 = vector.shape_cast %53 : vector<8xf32> to vector<8x1xf32>
    %c0_i32 = arith.constant 0 : i32
    %55 = vector.broadcast %c0_i32 : i32 to vector<8x32xi32>
    %56 = arith.cmpi eq, %20, %55 : vector<8x32xi32>
    %cst_24 = arith.constant 0.000000e+00 : f32
    %57 = vector.shape_cast %54 : vector<8x1xf32> to vector<8x1xf32>
    %58 = vector.broadcast %57 : vector<8x1xf32> to vector<8x32xf32>
    %59 = vector.broadcast %cst_24 : f32 to vector<8x32xf32>
    %60 = arith.select %56, %58, %59 : vector<8x32xi1>, vector<8x32xf32>
    %61 = arith.addf %21, %60 : vector<8x32xf32>
    %62 = vector.extract_strided_slice %17 {offsets = [0, 8], sizes = [8, 8], strides = [1, 1]} : vector<8x32xf32> to vector<8x8xf32>
    %63 = arith.mulf %50, %62 : vector<8x8xf32>
    %cst_25 = arith.constant dense<0.000000e+00> : vector<8xf32>
    %64 = vector.multi_reduction <add>, %63, %cst_25 [1] : vector<8x8xf32> to vector<8xf32>
    %65 = vector.shape_cast %64 : vector<8xf32> to vector<8x1xf32>
    %c8_i32 = arith.constant 8 : i32
    %66 = vector.broadcast %c8_i32 : i32 to vector<8x32xi32>
    %67 = arith.cmpi eq, %20, %66 : vector<8x32xi32>
    %cst_26 = arith.constant 0.000000e+00 : f32
    %68 = vector.shape_cast %65 : vector<8x1xf32> to vector<8x1xf32>
    %69 = vector.broadcast %68 : vector<8x1xf32> to vector<8x32xf32>
    %70 = vector.broadcast %cst_26 : f32 to vector<8x32xf32>
    %71 = arith.select %67, %69, %70 : vector<8x32xi1>, vector<8x32xf32>
    %72 = arith.addf %61, %71 : vector<8x32xf32>
    %73 = vector.extract_strided_slice %17 {offsets = [0, 16], sizes = [8, 8], strides = [1, 1]} : vector<8x32xf32> to vector<8x8xf32>
    %74 = arith.mulf %50, %73 : vector<8x8xf32>
    %cst_27 = arith.constant dense<0.000000e+00> : vector<8xf32>
    %75 = vector.multi_reduction <add>, %74, %cst_27 [1] : vector<8x8xf32> to vector<8xf32>
    %76 = vector.shape_cast %75 : vector<8xf32> to vector<8x1xf32>
    %c16_i32 = arith.constant 16 : i32
    %77 = vector.broadcast %c16_i32 : i32 to vector<8x32xi32>
    %78 = arith.cmpi eq, %20, %77 : vector<8x32xi32>
    %cst_28 = arith.constant 0.000000e+00 : f32
    %79 = vector.shape_cast %76 : vector<8x1xf32> to vector<8x1xf32>
    %80 = vector.broadcast %79 : vector<8x1xf32> to vector<8x32xf32>
    %81 = vector.broadcast %cst_28 : f32 to vector<8x32xf32>
    %82 = arith.select %78, %80, %81 : vector<8x32xi1>, vector<8x32xf32>
    %83 = arith.addf %72, %82 : vector<8x32xf32>
    %84 = vector.extract_strided_slice %17 {offsets = [0, 24], sizes = [8, 8], strides = [1, 1]} : vector<8x32xf32> to vector<8x8xf32>
    %85 = arith.mulf %50, %84 : vector<8x8xf32>
    %cst_29 = arith.constant dense<0.000000e+00> : vector<8xf32>
    %86 = vector.multi_reduction <add>, %85, %cst_29 [1] : vector<8x8xf32> to vector<8xf32>
    %87 = vector.shape_cast %86 : vector<8xf32> to vector<8x1xf32>
    %c24_i32 = arith.constant 24 : i32
    %88 = vector.broadcast %c24_i32 : i32 to vector<8x32xi32>
    %89 = arith.cmpi eq, %20, %88 : vector<8x32xi32>
    %cst_30 = arith.constant 0.000000e+00 : f32
    %90 = vector.shape_cast %87 : vector<8x1xf32> to vector<8x1xf32>
    %91 = vector.broadcast %90 : vector<8x1xf32> to vector<8x32xf32>
    %92 = vector.broadcast %cst_30 : f32 to vector<8x32xf32>
    %93 = arith.select %89, %91, %92 : vector<8x32xi1>, vector<8x32xf32>
    %94 = arith.addf %83, %93 : vector<8x32xf32>
    %95 = vector.extract_strided_slice %19 {offsets = [0, 1], sizes = [8, 1], strides = [1, 1]} : vector<8x32xf32> to vector<8x1xf32>
    %96 = vector.extract_strided_slice %11 {offsets = [0, 0], sizes = [8, 8], strides = [1, 1]} : vector<8x32xf32> to vector<8x8xf32>
    %97 = vector.broadcast %95 : vector<8x1xf32> to vector<8x8xf32>
    %98 = arith.mulf %97, %96 : vector<8x8xf32>
    %99 = vector.extract_strided_slice %19 {offsets = [0, 9], sizes = [8, 1], strides = [1, 1]} : vector<8x32xf32> to vector<8x1xf32>
    %100 = vector.extract_strided_slice %11 {offsets = [0, 8], sizes = [8, 8], strides = [1, 1]} : vector<8x32xf32> to vector<8x8xf32>
    %101 = vector.broadcast %99 : vector<8x1xf32> to vector<8x8xf32>
    %102 = arith.mulf %101, %100 : vector<8x8xf32>
    %103 = arith.addf %98, %102 : vector<8x8xf32>
    %104 = vector.extract_strided_slice %19 {offsets = [0, 17], sizes = [8, 1], strides = [1, 1]} : vector<8x32xf32> to vector<8x1xf32>
    %105 = vector.extract_strided_slice %11 {offsets = [0, 16], sizes = [8, 8], strides = [1, 1]} : vector<8x32xf32> to vector<8x8xf32>
    %106 = vector.broadcast %104 : vector<8x1xf32> to vector<8x8xf32>
    %107 = arith.mulf %106, %105 : vector<8x8xf32>
    %108 = arith.addf %103, %107 : vector<8x8xf32>
    %109 = vector.extract_strided_slice %19 {offsets = [0, 25], sizes = [8, 1], strides = [1, 1]} : vector<8x32xf32> to vector<8x1xf32>
    %110 = vector.extract_strided_slice %11 {offsets = [0, 24], sizes = [8, 8], strides = [1, 1]} : vector<8x32xf32> to vector<8x8xf32>
    %111 = vector.broadcast %109 : vector<8x1xf32> to vector<8x8xf32>
    %112 = arith.mulf %111, %110 : vector<8x8xf32>
    %113 = arith.addf %108, %112 : vector<8x8xf32>
    %cst_31 = arith.constant dense<0xFF800000> : vector<8xf32>
    %114 = vector.multi_reduction <maximumf>, %113, %cst_31 [1] : vector<8x8xf32> to vector<8xf32>
    %115 = vector.shape_cast %114 : vector<8xf32> to vector<8x1xf32>
    %116 = vector.broadcast %115 : vector<8x1xf32> to vector<8x8xf32>
    %117 = arith.subf %113, %116 : vector<8x8xf32>
    %118 = math.exp %117 : vector<8x8xf32>
    %cst_32 = arith.constant dense<0.000000e+00> : vector<8xf32>
    %119 = vector.multi_reduction <add>, %118, %cst_32 [1] : vector<8x8xf32> to vector<8xf32>
    %120 = vector.shape_cast %119 : vector<8xf32> to vector<8x1xf32>
    %121 = tpu.reciprocal %120 {approx = true} : vector<8x1xf32> -> vector<8x1xf32>
    %122 = vector.broadcast %121 : vector<8x1xf32> to vector<8x8xf32>
    %123 = arith.mulf %118, %122 : vector<8x8xf32>
    %124 = vector.extract_strided_slice %17 {offsets = [0, 0], sizes = [8, 8], strides = [1, 1]} : vector<8x32xf32> to vector<8x8xf32>
    %125 = arith.mulf %123, %124 : vector<8x8xf32>
    %cst_33 = arith.constant dense<0.000000e+00> : vector<8xf32>
    %126 = vector.multi_reduction <add>, %125, %cst_33 [1] : vector<8x8xf32> to vector<8xf32>
    %127 = vector.shape_cast %126 : vector<8xf32> to vector<8x1xf32>
    %c1_i32 = arith.constant 1 : i32
    %128 = vector.broadcast %c1_i32 : i32 to vector<8x32xi32>
    %129 = arith.cmpi eq, %20, %128 : vector<8x32xi32>
    %cst_34 = arith.constant 0.000000e+00 : f32
    %130 = vector.shape_cast %127 : vector<8x1xf32> to vector<8x1xf32>
    %131 = vector.broadcast %130 : vector<8x1xf32> to vector<8x32xf32>
    %132 = vector.broadcast %cst_34 : f32 to vector<8x32xf32>
    %133 = arith.select %129, %131, %132 : vector<8x32xi1>, vector<8x32xf32>
    %134 = arith.addf %94, %133 : vector<8x32xf32>
    %135 = vector.extract_strided_slice %17 {offsets = [0, 8], sizes = [8, 8], strides = [1, 1]} : vector<8x32xf32> to vector<8x8xf32>
    %136 = arith.mulf %123, %135 : vector<8x8xf32>
    %cst_35 = arith.constant dense<0.000000e+00> : vector<8xf32>
    %137 = vector.multi_reduction <add>, %136, %cst_35 [1] : vector<8x8xf32> to vector<8xf32>
    %138 = vector.shape_cast %137 : vector<8xf32> to vector<8x1xf32>
    %c9_i32 = arith.constant 9 : i32
    %139 = vector.broadcast %c9_i32 : i32 to vector<8x32xi32>
    %140 = arith.cmpi eq, %20, %139 : vector<8x32xi32>
    %cst_36 = arith.constant 0.000000e+00 : f32
    %141 = vector.shape_cast %138 : vector<8x1xf32> to vector<8x1xf32>
    %142 = vector.broadcast %141 : vector<8x1xf32> to vector<8x32xf32>
    %143 = vector.broadcast %cst_36 : f32 to vector<8x32xf32>
    %144 = arith.select %140, %142, %143 : vector<8x32xi1>, vector<8x32xf32>
    %145 = arith.addf %134, %144 : vector<8x32xf32>
    %146 = vector.extract_strided_slice %17 {offsets = [0, 16], sizes = [8, 8], strides = [1, 1]} : vector<8x32xf32> to vector<8x8xf32>
    %147 = arith.mulf %123, %146 : vector<8x8xf32>
    %cst_37 = arith.constant dense<0.000000e+00> : vector<8xf32>
    %148 = vector.multi_reduction <add>, %147, %cst_37 [1] : vector<8x8xf32> to vector<8xf32>
    %149 = vector.shape_cast %148 : vector<8xf32> to vector<8x1xf32>
    %c17_i32 = arith.constant 17 : i32
    %150 = vector.broadcast %c17_i32 : i32 to vector<8x32xi32>
    %151 = arith.cmpi eq, %20, %150 : vector<8x32xi32>
    %cst_38 = arith.constant 0.000000e+00 : f32
    %152 = vector.shape_cast %149 : vector<8x1xf32> to vector<8x1xf32>
    %153 = vector.broadcast %152 : vector<8x1xf32> to vector<8x32xf32>
    %154 = vector.broadcast %cst_38 : f32 to vector<8x32xf32>
    %155 = arith.select %151, %153, %154 : vector<8x32xi1>, vector<8x32xf32>
    %156 = arith.addf %145, %155 : vector<8x32xf32>
    %157 = vector.extract_strided_slice %17 {offsets = [0, 24], sizes = [8, 8], strides = [1, 1]} : vector<8x32xf32> to vector<8x8xf32>
    %158 = arith.mulf %123, %157 : vector<8x8xf32>
    %cst_39 = arith.constant dense<0.000000e+00> : vector<8xf32>
    %159 = vector.multi_reduction <add>, %158, %cst_39 [1] : vector<8x8xf32> to vector<8xf32>
    %160 = vector.shape_cast %159 : vector<8xf32> to vector<8x1xf32>
    %c25_i32 = arith.constant 25 : i32
    %161 = vector.broadcast %c25_i32 : i32 to vector<8x32xi32>
    %162 = arith.cmpi eq, %20, %161 : vector<8x32xi32>
    %cst_40 = arith.constant 0.000000e+00 : f32
    %163 = vector.shape_cast %160 : vector<8x1xf32> to vector<8x1xf32>
    %164 = vector.broadcast %163 : vector<8x1xf32> to vector<8x32xf32>
    %165 = vector.broadcast %cst_40 : f32 to vector<8x32xf32>
    %166 = arith.select %162, %164, %165 : vector<8x32xi1>, vector<8x32xf32>
    %167 = arith.addf %156, %166 : vector<8x32xf32>
    %168 = vector.extract_strided_slice %19 {offsets = [0, 2], sizes = [8, 1], strides = [1, 1]} : vector<8x32xf32> to vector<8x1xf32>
    %169 = vector.extract_strided_slice %11 {offsets = [0, 0], sizes = [8, 8], strides = [1, 1]} : vector<8x32xf32> to vector<8x8xf32>
    %170 = vector.broadcast %168 : vector<8x1xf32> to vector<8x8xf32>
    %171 = arith.mulf %170, %169 : vector<8x8xf32>
    %172 = vector.extract_strided_slice %19 {offsets = [0, 10], sizes = [8, 1], strides = [1, 1]} : vector<8x32xf32> to vector<8x1xf32>
    %173 = vector.extract_strided_slice %11 {offsets = [0, 8], sizes = [8, 8], strides = [1, 1]} : vector<8x32xf32> to vector<8x8xf32>
    %174 = vector.broadcast %172 : vector<8x1xf32> to vector<8x8xf32>
    %175 = arith.mulf %174, %173 : vector<8x8xf32>
    %176 = arith.addf %171, %175 : vector<8x8xf32>
    %177 = vector.extract_strided_slice %19 {offsets = [0, 18], sizes = [8, 1], strides = [1, 1]} : vector<8x32xf32> to vector<8x1xf32>
    %178 = vector.extract_strided_slice %11 {offsets = [0, 16], sizes = [8, 8], strides = [1, 1]} : vector<8x32xf32> to vector<8x8xf32>
    %179 = vector.broadcast %177 : vector<8x1xf32> to vector<8x8xf32>
    %180 = arith.mulf %179, %178 : vector<8x8xf32>
    %181 = arith.addf %176, %180 : vector<8x8xf32>
    %182 = vector.extract_strided_slice %19 {offsets = [0, 26], sizes = [8, 1], strides = [1, 1]} : vector<8x32xf32> to vector<8x1xf32>
    %183 = vector.extract_strided_slice %11 {offsets = [0, 24], sizes = [8, 8], strides = [1, 1]} : vector<8x32xf32> to vector<8x8xf32>
    %184 = vector.broadcast %182 : vector<8x1xf32> to vector<8x8xf32>
    %185 = arith.mulf %184, %183 : vector<8x8xf32>
    %186 = arith.addf %181, %185 : vector<8x8xf32>
    %cst_41 = arith.constant dense<0xFF800000> : vector<8xf32>
    %187 = vector.multi_reduction <maximumf>, %186, %cst_41 [1] : vector<8x8xf32> to vector<8xf32>
    %188 = vector.shape_cast %187 : vector<8xf32> to vector<8x1xf32>
    %189 = vector.broadcast %188 : vector<8x1xf32> to vector<8x8xf32>
    %190 = arith.subf %186, %189 : vector<8x8xf32>
    %191 = math.exp %190 : vector<8x8xf32>
    %cst_42 = arith.constant dense<0.000000e+00> : vector<8xf32>
    %192 = vector.multi_reduction <add>, %191, %cst_42 [1] : vector<8x8xf32> to vector<8xf32>
    %193 = vector.shape_cast %192 : vector<8xf32> to vector<8x1xf32>
    %194 = tpu.reciprocal %193 {approx = true} : vector<8x1xf32> -> vector<8x1xf32>
    %195 = vector.broadcast %194 : vector<8x1xf32> to vector<8x8xf32>
    %196 = arith.mulf %191, %195 : vector<8x8xf32>
    %197 = vector.extract_strided_slice %17 {offsets = [0, 0], sizes = [8, 8], strides = [1, 1]} : vector<8x32xf32> to vector<8x8xf32>
    %198 = arith.mulf %196, %197 : vector<8x8xf32>
    %cst_43 = arith.constant dense<0.000000e+00> : vector<8xf32>
    %199 = vector.multi_reduction <add>, %198, %cst_43 [1] : vector<8x8xf32> to vector<8xf32>
    %200 = vector.shape_cast %199 : vector<8xf32> to vector<8x1xf32>
    %c2_i32 = arith.constant 2 : i32
    %201 = vector.broadcast %c2_i32 : i32 to vector<8x32xi32>
    %202 = arith.cmpi eq, %20, %201 : vector<8x32xi32>
    %cst_44 = arith.constant 0.000000e+00 : f32
    %203 = vector.shape_cast %200 : vector<8x1xf32> to vector<8x1xf32>
    %204 = vector.broadcast %203 : vector<8x1xf32> to vector<8x32xf32>
    %205 = vector.broadcast %cst_44 : f32 to vector<8x32xf32>
    %206 = arith.select %202, %204, %205 : vector<8x32xi1>, vector<8x32xf32>
    %207 = arith.addf %167, %206 : vector<8x32xf32>
    %208 = vector.extract_strided_slice %17 {offsets = [0, 8], sizes = [8, 8], strides = [1, 1]} : vector<8x32xf32> to vector<8x8xf32>
    %209 = arith.mulf %196, %208 : vector<8x8xf32>
    %cst_45 = arith.constant dense<0.000000e+00> : vector<8xf32>
    %210 = vector.multi_reduction <add>, %209, %cst_45 [1] : vector<8x8xf32> to vector<8xf32>
    %211 = vector.shape_cast %210 : vector<8xf32> to vector<8x1xf32>
    %c10_i32 = arith.constant 10 : i32
    %212 = vector.broadcast %c10_i32 : i32 to vector<8x32xi32>
    %213 = arith.cmpi eq, %20, %212 : vector<8x32xi32>
    %cst_46 = arith.constant 0.000000e+00 : f32
    %214 = vector.shape_cast %211 : vector<8x1xf32> to vector<8x1xf32>
    %215 = vector.broadcast %214 : vector<8x1xf32> to vector<8x32xf32>
    %216 = vector.broadcast %cst_46 : f32 to vector<8x32xf32>
    %217 = arith.select %213, %215, %216 : vector<8x32xi1>, vector<8x32xf32>
    %218 = arith.addf %207, %217 : vector<8x32xf32>
    %219 = vector.extract_strided_slice %17 {offsets = [0, 16], sizes = [8, 8], strides = [1, 1]} : vector<8x32xf32> to vector<8x8xf32>
    %220 = arith.mulf %196, %219 : vector<8x8xf32>
    %cst_47 = arith.constant dense<0.000000e+00> : vector<8xf32>
    %221 = vector.multi_reduction <add>, %220, %cst_47 [1] : vector<8x8xf32> to vector<8xf32>
    %222 = vector.shape_cast %221 : vector<8xf32> to vector<8x1xf32>
    %c18_i32 = arith.constant 18 : i32
    %223 = vector.broadcast %c18_i32 : i32 to vector<8x32xi32>
    %224 = arith.cmpi eq, %20, %223 : vector<8x32xi32>
    %cst_48 = arith.constant 0.000000e+00 : f32
    %225 = vector.shape_cast %222 : vector<8x1xf32> to vector<8x1xf32>
    %226 = vector.broadcast %225 : vector<8x1xf32> to vector<8x32xf32>
    %227 = vector.broadcast %cst_48 : f32 to vector<8x32xf32>
    %228 = arith.select %224, %226, %227 : vector<8x32xi1>, vector<8x32xf32>
    %229 = arith.addf %218, %228 : vector<8x32xf32>
    %230 = vector.extract_strided_slice %17 {offsets = [0, 24], sizes = [8, 8], strides = [1, 1]} : vector<8x32xf32> to vector<8x8xf32>
    %231 = arith.mulf %196, %230 : vector<8x8xf32>
    %cst_49 = arith.constant dense<0.000000e+00> : vector<8xf32>
    %232 = vector.multi_reduction <add>, %231, %cst_49 [1] : vector<8x8xf32> to vector<8xf32>
    %233 = vector.shape_cast %232 : vector<8xf32> to vector<8x1xf32>
    %c26_i32 = arith.constant 26 : i32
    %234 = vector.broadcast %c26_i32 : i32 to vector<8x32xi32>
    %235 = arith.cmpi eq, %20, %234 : vector<8x32xi32>
    %cst_50 = arith.constant 0.000000e+00 : f32
    %236 = vector.shape_cast %233 : vector<8x1xf32> to vector<8x1xf32>
    %237 = vector.broadcast %236 : vector<8x1xf32> to vector<8x32xf32>
    %238 = vector.broadcast %cst_50 : f32 to vector<8x32xf32>
    %239 = arith.select %235, %237, %238 : vector<8x32xi1>, vector<8x32xf32>
    %240 = arith.addf %229, %239 : vector<8x32xf32>
    %241 = vector.extract_strided_slice %19 {offsets = [0, 3], sizes = [8, 1], strides = [1, 1]} : vector<8x32xf32> to vector<8x1xf32>
    %242 = vector.extract_strided_slice %11 {offsets = [0, 0], sizes = [8, 8], strides = [1, 1]} : vector<8x32xf32> to vector<8x8xf32>
    %243 = vector.broadcast %241 : vector<8x1xf32> to vector<8x8xf32>
    %244 = arith.mulf %243, %242 : vector<8x8xf32>
    %245 = vector.extract_strided_slice %19 {offsets = [0, 11], sizes = [8, 1], strides = [1, 1]} : vector<8x32xf32> to vector<8x1xf32>
    %246 = vector.extract_strided_slice %11 {offsets = [0, 8], sizes = [8, 8], strides = [1, 1]} : vector<8x32xf32> to vector<8x8xf32>
    %247 = vector.broadcast %245 : vector<8x1xf32> to vector<8x8xf32>
    %248 = arith.mulf %247, %246 : vector<8x8xf32>
    %249 = arith.addf %244, %248 : vector<8x8xf32>
    %250 = vector.extract_strided_slice %19 {offsets = [0, 19], sizes = [8, 1], strides = [1, 1]} : vector<8x32xf32> to vector<8x1xf32>
    %251 = vector.extract_strided_slice %11 {offsets = [0, 16], sizes = [8, 8], strides = [1, 1]} : vector<8x32xf32> to vector<8x8xf32>
    %252 = vector.broadcast %250 : vector<8x1xf32> to vector<8x8xf32>
    %253 = arith.mulf %252, %251 : vector<8x8xf32>
    %254 = arith.addf %249, %253 : vector<8x8xf32>
    %255 = vector.extract_strided_slice %19 {offsets = [0, 27], sizes = [8, 1], strides = [1, 1]} : vector<8x32xf32> to vector<8x1xf32>
    %256 = vector.extract_strided_slice %11 {offsets = [0, 24], sizes = [8, 8], strides = [1, 1]} : vector<8x32xf32> to vector<8x8xf32>
    %257 = vector.broadcast %255 : vector<8x1xf32> to vector<8x8xf32>
    %258 = arith.mulf %257, %256 : vector<8x8xf32>
    %259 = arith.addf %254, %258 : vector<8x8xf32>
    %cst_51 = arith.constant dense<0xFF800000> : vector<8xf32>
    %260 = vector.multi_reduction <maximumf>, %259, %cst_51 [1] : vector<8x8xf32> to vector<8xf32>
    %261 = vector.shape_cast %260 : vector<8xf32> to vector<8x1xf32>
    %262 = vector.broadcast %261 : vector<8x1xf32> to vector<8x8xf32>
    %263 = arith.subf %259, %262 : vector<8x8xf32>
    %264 = math.exp %263 : vector<8x8xf32>
    %cst_52 = arith.constant dense<0.000000e+00> : vector<8xf32>
    %265 = vector.multi_reduction <add>, %264, %cst_52 [1] : vector<8x8xf32> to vector<8xf32>
    %266 = vector.shape_cast %265 : vector<8xf32> to vector<8x1xf32>
    %267 = tpu.reciprocal %266 {approx = true} : vector<8x1xf32> -> vector<8x1xf32>
    %268 = vector.broadcast %267 : vector<8x1xf32> to vector<8x8xf32>
    %269 = arith.mulf %264, %268 : vector<8x8xf32>
    %270 = vector.extract_strided_slice %17 {offsets = [0, 0], sizes = [8, 8], strides = [1, 1]} : vector<8x32xf32> to vector<8x8xf32>
    %271 = arith.mulf %269, %270 : vector<8x8xf32>
    %cst_53 = arith.constant dense<0.000000e+00> : vector<8xf32>
    %272 = vector.multi_reduction <add>, %271, %cst_53 [1] : vector<8x8xf32> to vector<8xf32>
    %273 = vector.shape_cast %272 : vector<8xf32> to vector<8x1xf32>
    %c3_i32 = arith.constant 3 : i32
    %274 = vector.broadcast %c3_i32 : i32 to vector<8x32xi32>
    %275 = arith.cmpi eq, %20, %274 : vector<8x32xi32>
    %cst_54 = arith.constant 0.000000e+00 : f32
    %276 = vector.shape_cast %273 : vector<8x1xf32> to vector<8x1xf32>
    %277 = vector.broadcast %276 : vector<8x1xf32> to vector<8x32xf32>
    %278 = vector.broadcast %cst_54 : f32 to vector<8x32xf32>
    %279 = arith.select %275, %277, %278 : vector<8x32xi1>, vector<8x32xf32>
    %280 = arith.addf %240, %279 : vector<8x32xf32>
    %281 = vector.extract_strided_slice %17 {offsets = [0, 8], sizes = [8, 8], strides = [1, 1]} : vector<8x32xf32> to vector<8x8xf32>
    %282 = arith.mulf %269, %281 : vector<8x8xf32>
    %cst_55 = arith.constant dense<0.000000e+00> : vector<8xf32>
    %283 = vector.multi_reduction <add>, %282, %cst_55 [1] : vector<8x8xf32> to vector<8xf32>
    %284 = vector.shape_cast %283 : vector<8xf32> to vector<8x1xf32>
    %c11_i32 = arith.constant 11 : i32
    %285 = vector.broadcast %c11_i32 : i32 to vector<8x32xi32>
    %286 = arith.cmpi eq, %20, %285 : vector<8x32xi32>
    %cst_56 = arith.constant 0.000000e+00 : f32
    %287 = vector.shape_cast %284 : vector<8x1xf32> to vector<8x1xf32>
    %288 = vector.broadcast %287 : vector<8x1xf32> to vector<8x32xf32>
    %289 = vector.broadcast %cst_56 : f32 to vector<8x32xf32>
    %290 = arith.select %286, %288, %289 : vector<8x32xi1>, vector<8x32xf32>
    %291 = arith.addf %280, %290 : vector<8x32xf32>
    %292 = vector.extract_strided_slice %17 {offsets = [0, 16], sizes = [8, 8], strides = [1, 1]} : vector<8x32xf32> to vector<8x8xf32>
    %293 = arith.mulf %269, %292 : vector<8x8xf32>
    %cst_57 = arith.constant dense<0.000000e+00> : vector<8xf32>
    %294 = vector.multi_reduction <add>, %293, %cst_57 [1] : vector<8x8xf32> to vector<8xf32>
    %295 = vector.shape_cast %294 : vector<8xf32> to vector<8x1xf32>
    %c19_i32 = arith.constant 19 : i32
    %296 = vector.broadcast %c19_i32 : i32 to vector<8x32xi32>
    %297 = arith.cmpi eq, %20, %296 : vector<8x32xi32>
    %cst_58 = arith.constant 0.000000e+00 : f32
    %298 = vector.shape_cast %295 : vector<8x1xf32> to vector<8x1xf32>
    %299 = vector.broadcast %298 : vector<8x1xf32> to vector<8x32xf32>
    %300 = vector.broadcast %cst_58 : f32 to vector<8x32xf32>
    %301 = arith.select %297, %299, %300 : vector<8x32xi1>, vector<8x32xf32>
    %302 = arith.addf %291, %301 : vector<8x32xf32>
    %303 = vector.extract_strided_slice %17 {offsets = [0, 24], sizes = [8, 8], strides = [1, 1]} : vector<8x32xf32> to vector<8x8xf32>
    %304 = arith.mulf %269, %303 : vector<8x8xf32>
    %cst_59 = arith.constant dense<0.000000e+00> : vector<8xf32>
    %305 = vector.multi_reduction <add>, %304, %cst_59 [1] : vector<8x8xf32> to vector<8xf32>
    %306 = vector.shape_cast %305 : vector<8xf32> to vector<8x1xf32>
    %c27_i32 = arith.constant 27 : i32
    %307 = vector.broadcast %c27_i32 : i32 to vector<8x32xi32>
    %308 = arith.cmpi eq, %20, %307 : vector<8x32xi32>
    %cst_60 = arith.constant 0.000000e+00 : f32
    %309 = vector.shape_cast %306 : vector<8x1xf32> to vector<8x1xf32>
    %310 = vector.broadcast %309 : vector<8x1xf32> to vector<8x32xf32>
    %311 = vector.broadcast %cst_60 : f32 to vector<8x32xf32>
    %312 = arith.select %308, %310, %311 : vector<8x32xi1>, vector<8x32xf32>
    %313 = arith.addf %302, %312 : vector<8x32xf32>
    %314 = vector.extract_strided_slice %19 {offsets = [0, 4], sizes = [8, 1], strides = [1, 1]} : vector<8x32xf32> to vector<8x1xf32>
    %315 = vector.extract_strided_slice %11 {offsets = [0, 0], sizes = [8, 8], strides = [1, 1]} : vector<8x32xf32> to vector<8x8xf32>
    %316 = vector.broadcast %314 : vector<8x1xf32> to vector<8x8xf32>
    %317 = arith.mulf %316, %315 : vector<8x8xf32>
    %318 = vector.extract_strided_slice %19 {offsets = [0, 12], sizes = [8, 1], strides = [1, 1]} : vector<8x32xf32> to vector<8x1xf32>
    %319 = vector.extract_strided_slice %11 {offsets = [0, 8], sizes = [8, 8], strides = [1, 1]} : vector<8x32xf32> to vector<8x8xf32>
    %320 = vector.broadcast %318 : vector<8x1xf32> to vector<8x8xf32>
    %321 = arith.mulf %320, %319 : vector<8x8xf32>
    %322 = arith.addf %317, %321 : vector<8x8xf32>
    %323 = vector.extract_strided_slice %19 {offsets = [0, 20], sizes = [8, 1], strides = [1, 1]} : vector<8x32xf32> to vector<8x1xf32>
    %324 = vector.extract_strided_slice %11 {offsets = [0, 16], sizes = [8, 8], strides = [1, 1]} : vector<8x32xf32> to vector<8x8xf32>
    %325 = vector.broadcast %323 : vector<8x1xf32> to vector<8x8xf32>
    %326 = arith.mulf %325, %324 : vector<8x8xf32>
    %327 = arith.addf %322, %326 : vector<8x8xf32>
    %328 = vector.extract_strided_slice %19 {offsets = [0, 28], sizes = [8, 1], strides = [1, 1]} : vector<8x32xf32> to vector<8x1xf32>
    %329 = vector.extract_strided_slice %11 {offsets = [0, 24], sizes = [8, 8], strides = [1, 1]} : vector<8x32xf32> to vector<8x8xf32>
    %330 = vector.broadcast %328 : vector<8x1xf32> to vector<8x8xf32>
    %331 = arith.mulf %330, %329 : vector<8x8xf32>
    %332 = arith.addf %327, %331 : vector<8x8xf32>
    %cst_61 = arith.constant dense<0xFF800000> : vector<8xf32>
    %333 = vector.multi_reduction <maximumf>, %332, %cst_61 [1] : vector<8x8xf32> to vector<8xf32>
    %334 = vector.shape_cast %333 : vector<8xf32> to vector<8x1xf32>
    %335 = vector.broadcast %334 : vector<8x1xf32> to vector<8x8xf32>
    %336 = arith.subf %332, %335 : vector<8x8xf32>
    %337 = math.exp %336 : vector<8x8xf32>
    %cst_62 = arith.constant dense<0.000000e+00> : vector<8xf32>
    %338 = vector.multi_reduction <add>, %337, %cst_62 [1] : vector<8x8xf32> to vector<8xf32>
    %339 = vector.shape_cast %338 : vector<8xf32> to vector<8x1xf32>
    %340 = tpu.reciprocal %339 {approx = true} : vector<8x1xf32> -> vector<8x1xf32>
    %341 = vector.broadcast %340 : vector<8x1xf32> to vector<8x8xf32>
    %342 = arith.mulf %337, %341 : vector<8x8xf32>
    %343 = vector.extract_strided_slice %17 {offsets = [0, 0], sizes = [8, 8], strides = [1, 1]} : vector<8x32xf32> to vector<8x8xf32>
    %344 = arith.mulf %342, %343 : vector<8x8xf32>
    %cst_63 = arith.constant dense<0.000000e+00> : vector<8xf32>
    %345 = vector.multi_reduction <add>, %344, %cst_63 [1] : vector<8x8xf32> to vector<8xf32>
    %346 = vector.shape_cast %345 : vector<8xf32> to vector<8x1xf32>
    %c4_i32 = arith.constant 4 : i32
    %347 = vector.broadcast %c4_i32 : i32 to vector<8x32xi32>
    %348 = arith.cmpi eq, %20, %347 : vector<8x32xi32>
    %cst_64 = arith.constant 0.000000e+00 : f32
    %349 = vector.shape_cast %346 : vector<8x1xf32> to vector<8x1xf32>
    %350 = vector.broadcast %349 : vector<8x1xf32> to vector<8x32xf32>
    %351 = vector.broadcast %cst_64 : f32 to vector<8x32xf32>
    %352 = arith.select %348, %350, %351 : vector<8x32xi1>, vector<8x32xf32>
    %353 = arith.addf %313, %352 : vector<8x32xf32>
    %354 = vector.extract_strided_slice %17 {offsets = [0, 8], sizes = [8, 8], strides = [1, 1]} : vector<8x32xf32> to vector<8x8xf32>
    %355 = arith.mulf %342, %354 : vector<8x8xf32>
    %cst_65 = arith.constant dense<0.000000e+00> : vector<8xf32>
    %356 = vector.multi_reduction <add>, %355, %cst_65 [1] : vector<8x8xf32> to vector<8xf32>
    %357 = vector.shape_cast %356 : vector<8xf32> to vector<8x1xf32>
    %c12_i32 = arith.constant 12 : i32
    %358 = vector.broadcast %c12_i32 : i32 to vector<8x32xi32>
    %359 = arith.cmpi eq, %20, %358 : vector<8x32xi32>
    %cst_66 = arith.constant 0.000000e+00 : f32
    %360 = vector.shape_cast %357 : vector<8x1xf32> to vector<8x1xf32>
    %361 = vector.broadcast %360 : vector<8x1xf32> to vector<8x32xf32>
    %362 = vector.broadcast %cst_66 : f32 to vector<8x32xf32>
    %363 = arith.select %359, %361, %362 : vector<8x32xi1>, vector<8x32xf32>
    %364 = arith.addf %353, %363 : vector<8x32xf32>
    %365 = vector.extract_strided_slice %17 {offsets = [0, 16], sizes = [8, 8], strides = [1, 1]} : vector<8x32xf32> to vector<8x8xf32>
    %366 = arith.mulf %342, %365 : vector<8x8xf32>
    %cst_67 = arith.constant dense<0.000000e+00> : vector<8xf32>
    %367 = vector.multi_reduction <add>, %366, %cst_67 [1] : vector<8x8xf32> to vector<8xf32>
    %368 = vector.shape_cast %367 : vector<8xf32> to vector<8x1xf32>
    %c20_i32 = arith.constant 20 : i32
    %369 = vector.broadcast %c20_i32 : i32 to vector<8x32xi32>
    %370 = arith.cmpi eq, %20, %369 : vector<8x32xi32>
    %cst_68 = arith.constant 0.000000e+00 : f32
    %371 = vector.shape_cast %368 : vector<8x1xf32> to vector<8x1xf32>
    %372 = vector.broadcast %371 : vector<8x1xf32> to vector<8x32xf32>
    %373 = vector.broadcast %cst_68 : f32 to vector<8x32xf32>
    %374 = arith.select %370, %372, %373 : vector<8x32xi1>, vector<8x32xf32>
    %375 = arith.addf %364, %374 : vector<8x32xf32>
    %376 = vector.extract_strided_slice %17 {offsets = [0, 24], sizes = [8, 8], strides = [1, 1]} : vector<8x32xf32> to vector<8x8xf32>
    %377 = arith.mulf %342, %376 : vector<8x8xf32>
    %cst_69 = arith.constant dense<0.000000e+00> : vector<8xf32>
    %378 = vector.multi_reduction <add>, %377, %cst_69 [1] : vector<8x8xf32> to vector<8xf32>
    %379 = vector.shape_cast %378 : vector<8xf32> to vector<8x1xf32>
    %c28_i32 = arith.constant 28 : i32
    %380 = vector.broadcast %c28_i32 : i32 to vector<8x32xi32>
    %381 = arith.cmpi eq, %20, %380 : vector<8x32xi32>
    %cst_70 = arith.constant 0.000000e+00 : f32
    %382 = vector.shape_cast %379 : vector<8x1xf32> to vector<8x1xf32>
    %383 = vector.broadcast %382 : vector<8x1xf32> to vector<8x32xf32>
    %384 = vector.broadcast %cst_70 : f32 to vector<8x32xf32>
    %385 = arith.select %381, %383, %384 : vector<8x32xi1>, vector<8x32xf32>
    %386 = arith.addf %375, %385 : vector<8x32xf32>
    %387 = vector.extract_strided_slice %19 {offsets = [0, 5], sizes = [8, 1], strides = [1, 1]} : vector<8x32xf32> to vector<8x1xf32>
    %388 = vector.extract_strided_slice %11 {offsets = [0, 0], sizes = [8, 8], strides = [1, 1]} : vector<8x32xf32> to vector<8x8xf32>
    %389 = vector.broadcast %387 : vector<8x1xf32> to vector<8x8xf32>
    %390 = arith.mulf %389, %388 : vector<8x8xf32>
    %391 = vector.extract_strided_slice %19 {offsets = [0, 13], sizes = [8, 1], strides = [1, 1]} : vector<8x32xf32> to vector<8x1xf32>
    %392 = vector.extract_strided_slice %11 {offsets = [0, 8], sizes = [8, 8], strides = [1, 1]} : vector<8x32xf32> to vector<8x8xf32>
    %393 = vector.broadcast %391 : vector<8x1xf32> to vector<8x8xf32>
    %394 = arith.mulf %393, %392 : vector<8x8xf32>
    %395 = arith.addf %390, %394 : vector<8x8xf32>
    %396 = vector.extract_strided_slice %19 {offsets = [0, 21], sizes = [8, 1], strides = [1, 1]} : vector<8x32xf32> to vector<8x1xf32>
    %397 = vector.extract_strided_slice %11 {offsets = [0, 16], sizes = [8, 8], strides = [1, 1]} : vector<8x32xf32> to vector<8x8xf32>
    %398 = vector.broadcast %396 : vector<8x1xf32> to vector<8x8xf32>
    %399 = arith.mulf %398, %397 : vector<8x8xf32>
    %400 = arith.addf %395, %399 : vector<8x8xf32>
    %401 = vector.extract_strided_slice %19 {offsets = [0, 29], sizes = [8, 1], strides = [1, 1]} : vector<8x32xf32> to vector<8x1xf32>
    %402 = vector.extract_strided_slice %11 {offsets = [0, 24], sizes = [8, 8], strides = [1, 1]} : vector<8x32xf32> to vector<8x8xf32>
    %403 = vector.broadcast %401 : vector<8x1xf32> to vector<8x8xf32>
    %404 = arith.mulf %403, %402 : vector<8x8xf32>
    %405 = arith.addf %400, %404 : vector<8x8xf32>
    %cst_71 = arith.constant dense<0xFF800000> : vector<8xf32>
    %406 = vector.multi_reduction <maximumf>, %405, %cst_71 [1] : vector<8x8xf32> to vector<8xf32>
    %407 = vector.shape_cast %406 : vector<8xf32> to vector<8x1xf32>
    %408 = vector.broadcast %407 : vector<8x1xf32> to vector<8x8xf32>
    %409 = arith.subf %405, %408 : vector<8x8xf32>
    %410 = math.exp %409 : vector<8x8xf32>
    %cst_72 = arith.constant dense<0.000000e+00> : vector<8xf32>
    %411 = vector.multi_reduction <add>, %410, %cst_72 [1] : vector<8x8xf32> to vector<8xf32>
    %412 = vector.shape_cast %411 : vector<8xf32> to vector<8x1xf32>
    %413 = tpu.reciprocal %412 {approx = true} : vector<8x1xf32> -> vector<8x1xf32>
    %414 = vector.broadcast %413 : vector<8x1xf32> to vector<8x8xf32>
    %415 = arith.mulf %410, %414 : vector<8x8xf32>
    %416 = vector.extract_strided_slice %17 {offsets = [0, 0], sizes = [8, 8], strides = [1, 1]} : vector<8x32xf32> to vector<8x8xf32>
    %417 = arith.mulf %415, %416 : vector<8x8xf32>
    %cst_73 = arith.constant dense<0.000000e+00> : vector<8xf32>
    %418 = vector.multi_reduction <add>, %417, %cst_73 [1] : vector<8x8xf32> to vector<8xf32>
    %419 = vector.shape_cast %418 : vector<8xf32> to vector<8x1xf32>
    %c5_i32 = arith.constant 5 : i32
    %420 = vector.broadcast %c5_i32 : i32 to vector<8x32xi32>
    %421 = arith.cmpi eq, %20, %420 : vector<8x32xi32>
    %cst_74 = arith.constant 0.000000e+00 : f32
    %422 = vector.shape_cast %419 : vector<8x1xf32> to vector<8x1xf32>
    %423 = vector.broadcast %422 : vector<8x1xf32> to vector<8x32xf32>
    %424 = vector.broadcast %cst_74 : f32 to vector<8x32xf32>
    %425 = arith.select %421, %423, %424 : vector<8x32xi1>, vector<8x32xf32>
    %426 = arith.addf %386, %425 : vector<8x32xf32>
    %427 = vector.extract_strided_slice %17 {offsets = [0, 8], sizes = [8, 8], strides = [1, 1]} : vector<8x32xf32> to vector<8x8xf32>
    %428 = arith.mulf %415, %427 : vector<8x8xf32>
    %cst_75 = arith.constant dense<0.000000e+00> : vector<8xf32>
    %429 = vector.multi_reduction <add>, %428, %cst_75 [1] : vector<8x8xf32> to vector<8xf32>
    %430 = vector.shape_cast %429 : vector<8xf32> to vector<8x1xf32>
    %c13_i32 = arith.constant 13 : i32
    %431 = vector.broadcast %c13_i32 : i32 to vector<8x32xi32>
    %432 = arith.cmpi eq, %20, %431 : vector<8x32xi32>
    %cst_76 = arith.constant 0.000000e+00 : f32
    %433 = vector.shape_cast %430 : vector<8x1xf32> to vector<8x1xf32>
    %434 = vector.broadcast %433 : vector<8x1xf32> to vector<8x32xf32>
    %435 = vector.broadcast %cst_76 : f32 to vector<8x32xf32>
    %436 = arith.select %432, %434, %435 : vector<8x32xi1>, vector<8x32xf32>
    %437 = arith.addf %426, %436 : vector<8x32xf32>
    %438 = vector.extract_strided_slice %17 {offsets = [0, 16], sizes = [8, 8], strides = [1, 1]} : vector<8x32xf32> to vector<8x8xf32>
    %439 = arith.mulf %415, %438 : vector<8x8xf32>
    %cst_77 = arith.constant dense<0.000000e+00> : vector<8xf32>
    %440 = vector.multi_reduction <add>, %439, %cst_77 [1] : vector<8x8xf32> to vector<8xf32>
    %441 = vector.shape_cast %440 : vector<8xf32> to vector<8x1xf32>
    %c21_i32 = arith.constant 21 : i32
    %442 = vector.broadcast %c21_i32 : i32 to vector<8x32xi32>
    %443 = arith.cmpi eq, %20, %442 : vector<8x32xi32>
    %cst_78 = arith.constant 0.000000e+00 : f32
    %444 = vector.shape_cast %441 : vector<8x1xf32> to vector<8x1xf32>
    %445 = vector.broadcast %444 : vector<8x1xf32> to vector<8x32xf32>
    %446 = vector.broadcast %cst_78 : f32 to vector<8x32xf32>
    %447 = arith.select %443, %445, %446 : vector<8x32xi1>, vector<8x32xf32>
    %448 = arith.addf %437, %447 : vector<8x32xf32>
    %449 = vector.extract_strided_slice %17 {offsets = [0, 24], sizes = [8, 8], strides = [1, 1]} : vector<8x32xf32> to vector<8x8xf32>
    %450 = arith.mulf %415, %449 : vector<8x8xf32>
    %cst_79 = arith.constant dense<0.000000e+00> : vector<8xf32>
    %451 = vector.multi_reduction <add>, %450, %cst_79 [1] : vector<8x8xf32> to vector<8xf32>
    %452 = vector.shape_cast %451 : vector<8xf32> to vector<8x1xf32>
    %c29_i32 = arith.constant 29 : i32
    %453 = vector.broadcast %c29_i32 : i32 to vector<8x32xi32>
    %454 = arith.cmpi eq, %20, %453 : vector<8x32xi32>
    %cst_80 = arith.constant 0.000000e+00 : f32
    %455 = vector.shape_cast %452 : vector<8x1xf32> to vector<8x1xf32>
    %456 = vector.broadcast %455 : vector<8x1xf32> to vector<8x32xf32>
    %457 = vector.broadcast %cst_80 : f32 to vector<8x32xf32>
    %458 = arith.select %454, %456, %457 : vector<8x32xi1>, vector<8x32xf32>
    %459 = arith.addf %448, %458 : vector<8x32xf32>
    %460 = vector.extract_strided_slice %19 {offsets = [0, 6], sizes = [8, 1], strides = [1, 1]} : vector<8x32xf32> to vector<8x1xf32>
    %461 = vector.extract_strided_slice %11 {offsets = [0, 0], sizes = [8, 8], strides = [1, 1]} : vector<8x32xf32> to vector<8x8xf32>
    %462 = vector.broadcast %460 : vector<8x1xf32> to vector<8x8xf32>
    %463 = arith.mulf %462, %461 : vector<8x8xf32>
    %464 = vector.extract_strided_slice %19 {offsets = [0, 14], sizes = [8, 1], strides = [1, 1]} : vector<8x32xf32> to vector<8x1xf32>
    %465 = vector.extract_strided_slice %11 {offsets = [0, 8], sizes = [8, 8], strides = [1, 1]} : vector<8x32xf32> to vector<8x8xf32>
    %466 = vector.broadcast %464 : vector<8x1xf32> to vector<8x8xf32>
    %467 = arith.mulf %466, %465 : vector<8x8xf32>
    %468 = arith.addf %463, %467 : vector<8x8xf32>
    %469 = vector.extract_strided_slice %19 {offsets = [0, 22], sizes = [8, 1], strides = [1, 1]} : vector<8x32xf32> to vector<8x1xf32>
    %470 = vector.extract_strided_slice %11 {offsets = [0, 16], sizes = [8, 8], strides = [1, 1]} : vector<8x32xf32> to vector<8x8xf32>
    %471 = vector.broadcast %469 : vector<8x1xf32> to vector<8x8xf32>
    %472 = arith.mulf %471, %470 : vector<8x8xf32>
    %473 = arith.addf %468, %472 : vector<8x8xf32>
    %474 = vector.extract_strided_slice %19 {offsets = [0, 30], sizes = [8, 1], strides = [1, 1]} : vector<8x32xf32> to vector<8x1xf32>
    %475 = vector.extract_strided_slice %11 {offsets = [0, 24], sizes = [8, 8], strides = [1, 1]} : vector<8x32xf32> to vector<8x8xf32>
    %476 = vector.broadcast %474 : vector<8x1xf32> to vector<8x8xf32>
    %477 = arith.mulf %476, %475 : vector<8x8xf32>
    %478 = arith.addf %473, %477 : vector<8x8xf32>
    %cst_81 = arith.constant dense<0xFF800000> : vector<8xf32>
    %479 = vector.multi_reduction <maximumf>, %478, %cst_81 [1] : vector<8x8xf32> to vector<8xf32>
    %480 = vector.shape_cast %479 : vector<8xf32> to vector<8x1xf32>
    %481 = vector.broadcast %480 : vector<8x1xf32> to vector<8x8xf32>
    %482 = arith.subf %478, %481 : vector<8x8xf32>
    %483 = math.exp %482 : vector<8x8xf32>
    %cst_82 = arith.constant dense<0.000000e+00> : vector<8xf32>
    %484 = vector.multi_reduction <add>, %483, %cst_82 [1] : vector<8x8xf32> to vector<8xf32>
    %485 = vector.shape_cast %484 : vector<8xf32> to vector<8x1xf32>
    %486 = tpu.reciprocal %485 {approx = true} : vector<8x1xf32> -> vector<8x1xf32>
    %487 = vector.broadcast %486 : vector<8x1xf32> to vector<8x8xf32>
    %488 = arith.mulf %483, %487 : vector<8x8xf32>
    %489 = vector.extract_strided_slice %17 {offsets = [0, 0], sizes = [8, 8], strides = [1, 1]} : vector<8x32xf32> to vector<8x8xf32>
    %490 = arith.mulf %488, %489 : vector<8x8xf32>
    %cst_83 = arith.constant dense<0.000000e+00> : vector<8xf32>
    %491 = vector.multi_reduction <add>, %490, %cst_83 [1] : vector<8x8xf32> to vector<8xf32>
    %492 = vector.shape_cast %491 : vector<8xf32> to vector<8x1xf32>
    %c6_i32 = arith.constant 6 : i32
    %493 = vector.broadcast %c6_i32 : i32 to vector<8x32xi32>
    %494 = arith.cmpi eq, %20, %493 : vector<8x32xi32>
    %cst_84 = arith.constant 0.000000e+00 : f32
    %495 = vector.shape_cast %492 : vector<8x1xf32> to vector<8x1xf32>
    %496 = vector.broadcast %495 : vector<8x1xf32> to vector<8x32xf32>
    %497 = vector.broadcast %cst_84 : f32 to vector<8x32xf32>
    %498 = arith.select %494, %496, %497 : vector<8x32xi1>, vector<8x32xf32>
    %499 = arith.addf %459, %498 : vector<8x32xf32>
    %500 = vector.extract_strided_slice %17 {offsets = [0, 8], sizes = [8, 8], strides = [1, 1]} : vector<8x32xf32> to vector<8x8xf32>
    %501 = arith.mulf %488, %500 : vector<8x8xf32>
    %cst_85 = arith.constant dense<0.000000e+00> : vector<8xf32>
    %502 = vector.multi_reduction <add>, %501, %cst_85 [1] : vector<8x8xf32> to vector<8xf32>
    %503 = vector.shape_cast %502 : vector<8xf32> to vector<8x1xf32>
    %c14_i32 = arith.constant 14 : i32
    %504 = vector.broadcast %c14_i32 : i32 to vector<8x32xi32>
    %505 = arith.cmpi eq, %20, %504 : vector<8x32xi32>
    %cst_86 = arith.constant 0.000000e+00 : f32
    %506 = vector.shape_cast %503 : vector<8x1xf32> to vector<8x1xf32>
    %507 = vector.broadcast %506 : vector<8x1xf32> to vector<8x32xf32>
    %508 = vector.broadcast %cst_86 : f32 to vector<8x32xf32>
    %509 = arith.select %505, %507, %508 : vector<8x32xi1>, vector<8x32xf32>
    %510 = arith.addf %499, %509 : vector<8x32xf32>
    %511 = vector.extract_strided_slice %17 {offsets = [0, 16], sizes = [8, 8], strides = [1, 1]} : vector<8x32xf32> to vector<8x8xf32>
    %512 = arith.mulf %488, %511 : vector<8x8xf32>
    %cst_87 = arith.constant dense<0.000000e+00> : vector<8xf32>
    %513 = vector.multi_reduction <add>, %512, %cst_87 [1] : vector<8x8xf32> to vector<8xf32>
    %514 = vector.shape_cast %513 : vector<8xf32> to vector<8x1xf32>
    %c22_i32 = arith.constant 22 : i32
    %515 = vector.broadcast %c22_i32 : i32 to vector<8x32xi32>
    %516 = arith.cmpi eq, %20, %515 : vector<8x32xi32>
    %cst_88 = arith.constant 0.000000e+00 : f32
    %517 = vector.shape_cast %514 : vector<8x1xf32> to vector<8x1xf32>
    %518 = vector.broadcast %517 : vector<8x1xf32> to vector<8x32xf32>
    %519 = vector.broadcast %cst_88 : f32 to vector<8x32xf32>
    %520 = arith.select %516, %518, %519 : vector<8x32xi1>, vector<8x32xf32>
    %521 = arith.addf %510, %520 : vector<8x32xf32>
    %522 = vector.extract_strided_slice %17 {offsets = [0, 24], sizes = [8, 8], strides = [1, 1]} : vector<8x32xf32> to vector<8x8xf32>
    %523 = arith.mulf %488, %522 : vector<8x8xf32>
    %cst_89 = arith.constant dense<0.000000e+00> : vector<8xf32>
    %524 = vector.multi_reduction <add>, %523, %cst_89 [1] : vector<8x8xf32> to vector<8xf32>
    %525 = vector.shape_cast %524 : vector<8xf32> to vector<8x1xf32>
    %c30_i32 = arith.constant 30 : i32
    %526 = vector.broadcast %c30_i32 : i32 to vector<8x32xi32>
    %527 = arith.cmpi eq, %20, %526 : vector<8x32xi32>
    %cst_90 = arith.constant 0.000000e+00 : f32
    %528 = vector.shape_cast %525 : vector<8x1xf32> to vector<8x1xf32>
    %529 = vector.broadcast %528 : vector<8x1xf32> to vector<8x32xf32>
    %530 = vector.broadcast %cst_90 : f32 to vector<8x32xf32>
    %531 = arith.select %527, %529, %530 : vector<8x32xi1>, vector<8x32xf32>
    %532 = arith.addf %521, %531 : vector<8x32xf32>
    %533 = vector.extract_strided_slice %19 {offsets = [0, 7], sizes = [8, 1], strides = [1, 1]} : vector<8x32xf32> to vector<8x1xf32>
    %534 = vector.extract_strided_slice %11 {offsets = [0, 0], sizes = [8, 8], strides = [1, 1]} : vector<8x32xf32> to vector<8x8xf32>
    %535 = vector.broadcast %533 : vector<8x1xf32> to vector<8x8xf32>
    %536 = arith.mulf %535, %534 : vector<8x8xf32>
    %537 = vector.extract_strided_slice %19 {offsets = [0, 15], sizes = [8, 1], strides = [1, 1]} : vector<8x32xf32> to vector<8x1xf32>
    %538 = vector.extract_strided_slice %11 {offsets = [0, 8], sizes = [8, 8], strides = [1, 1]} : vector<8x32xf32> to vector<8x8xf32>
    %539 = vector.broadcast %537 : vector<8x1xf32> to vector<8x8xf32>
    %540 = arith.mulf %539, %538 : vector<8x8xf32>
    %541 = arith.addf %536, %540 : vector<8x8xf32>
    %542 = vector.extract_strided_slice %19 {offsets = [0, 23], sizes = [8, 1], strides = [1, 1]} : vector<8x32xf32> to vector<8x1xf32>
    %543 = vector.extract_strided_slice %11 {offsets = [0, 16], sizes = [8, 8], strides = [1, 1]} : vector<8x32xf32> to vector<8x8xf32>
    %544 = vector.broadcast %542 : vector<8x1xf32> to vector<8x8xf32>
    %545 = arith.mulf %544, %543 : vector<8x8xf32>
    %546 = arith.addf %541, %545 : vector<8x8xf32>
    %547 = vector.extract_strided_slice %19 {offsets = [0, 31], sizes = [8, 1], strides = [1, 1]} : vector<8x32xf32> to vector<8x1xf32>
    %548 = vector.extract_strided_slice %11 {offsets = [0, 24], sizes = [8, 8], strides = [1, 1]} : vector<8x32xf32> to vector<8x8xf32>
    %549 = vector.broadcast %547 : vector<8x1xf32> to vector<8x8xf32>
    %550 = arith.mulf %549, %548 : vector<8x8xf32>
    %551 = arith.addf %546, %550 : vector<8x8xf32>
    %cst_91 = arith.constant dense<0xFF800000> : vector<8xf32>
    %552 = vector.multi_reduction <maximumf>, %551, %cst_91 [1] : vector<8x8xf32> to vector<8xf32>
    %553 = vector.shape_cast %552 : vector<8xf32> to vector<8x1xf32>
    %554 = vector.broadcast %553 : vector<8x1xf32> to vector<8x8xf32>
    %555 = arith.subf %551, %554 : vector<8x8xf32>
    %556 = math.exp %555 : vector<8x8xf32>
    %cst_92 = arith.constant dense<0.000000e+00> : vector<8xf32>
    %557 = vector.multi_reduction <add>, %556, %cst_92 [1] : vector<8x8xf32> to vector<8xf32>
    %558 = vector.shape_cast %557 : vector<8xf32> to vector<8x1xf32>
    %559 = tpu.reciprocal %558 {approx = true} : vector<8x1xf32> -> vector<8x1xf32>
    %560 = vector.broadcast %559 : vector<8x1xf32> to vector<8x8xf32>
    %561 = arith.mulf %556, %560 : vector<8x8xf32>
    %562 = vector.extract_strided_slice %17 {offsets = [0, 0], sizes = [8, 8], strides = [1, 1]} : vector<8x32xf32> to vector<8x8xf32>
    %563 = arith.mulf %561, %562 : vector<8x8xf32>
    %cst_93 = arith.constant dense<0.000000e+00> : vector<8xf32>
    %564 = vector.multi_reduction <add>, %563, %cst_93 [1] : vector<8x8xf32> to vector<8xf32>
    %565 = vector.shape_cast %564 : vector<8xf32> to vector<8x1xf32>
    %c7_i32 = arith.constant 7 : i32
    %566 = vector.broadcast %c7_i32 : i32 to vector<8x32xi32>
    %567 = arith.cmpi eq, %20, %566 : vector<8x32xi32>
    %cst_94 = arith.constant 0.000000e+00 : f32
    %568 = vector.shape_cast %565 : vector<8x1xf32> to vector<8x1xf32>
    %569 = vector.broadcast %568 : vector<8x1xf32> to vector<8x32xf32>
    %570 = vector.broadcast %cst_94 : f32 to vector<8x32xf32>
    %571 = arith.select %567, %569, %570 : vector<8x32xi1>, vector<8x32xf32>
    %572 = arith.addf %532, %571 : vector<8x32xf32>
    %573 = vector.extract_strided_slice %17 {offsets = [0, 8], sizes = [8, 8], strides = [1, 1]} : vector<8x32xf32> to vector<8x8xf32>
    %574 = arith.mulf %561, %573 : vector<8x8xf32>
    %cst_95 = arith.constant dense<0.000000e+00> : vector<8xf32>
    %575 = vector.multi_reduction <add>, %574, %cst_95 [1] : vector<8x8xf32> to vector<8xf32>
    %576 = vector.shape_cast %575 : vector<8xf32> to vector<8x1xf32>
    %c15_i32 = arith.constant 15 : i32
    %577 = vector.broadcast %c15_i32 : i32 to vector<8x32xi32>
    %578 = arith.cmpi eq, %20, %577 : vector<8x32xi32>
    %cst_96 = arith.constant 0.000000e+00 : f32
    %579 = vector.shape_cast %576 : vector<8x1xf32> to vector<8x1xf32>
    %580 = vector.broadcast %579 : vector<8x1xf32> to vector<8x32xf32>
    %581 = vector.broadcast %cst_96 : f32 to vector<8x32xf32>
    %582 = arith.select %578, %580, %581 : vector<8x32xi1>, vector<8x32xf32>
    %583 = arith.addf %572, %582 : vector<8x32xf32>
    %584 = vector.extract_strided_slice %17 {offsets = [0, 16], sizes = [8, 8], strides = [1, 1]} : vector<8x32xf32> to vector<8x8xf32>
    %585 = arith.mulf %561, %584 : vector<8x8xf32>
    %cst_97 = arith.constant dense<0.000000e+00> : vector<8xf32>
    %586 = vector.multi_reduction <add>, %585, %cst_97 [1] : vector<8x8xf32> to vector<8xf32>
    %587 = vector.shape_cast %586 : vector<8xf32> to vector<8x1xf32>
    %c23_i32 = arith.constant 23 : i32
    %588 = vector.broadcast %c23_i32 : i32 to vector<8x32xi32>
    %589 = arith.cmpi eq, %20, %588 : vector<8x32xi32>
    %cst_98 = arith.constant 0.000000e+00 : f32
    %590 = vector.shape_cast %587 : vector<8x1xf32> to vector<8x1xf32>
    %591 = vector.broadcast %590 : vector<8x1xf32> to vector<8x32xf32>
    %592 = vector.broadcast %cst_98 : f32 to vector<8x32xf32>
    %593 = arith.select %589, %591, %592 : vector<8x32xi1>, vector<8x32xf32>
    %594 = arith.addf %583, %593 : vector<8x32xf32>
    %595 = vector.extract_strided_slice %17 {offsets = [0, 24], sizes = [8, 8], strides = [1, 1]} : vector<8x32xf32> to vector<8x8xf32>
    %596 = arith.mulf %561, %595 : vector<8x8xf32>
    %cst_99 = arith.constant dense<0.000000e+00> : vector<8xf32>
    %597 = vector.multi_reduction <add>, %596, %cst_99 [1] : vector<8x8xf32> to vector<8xf32>
    %598 = vector.shape_cast %597 : vector<8xf32> to vector<8x1xf32>
    %c31_i32 = arith.constant 31 : i32
    %599 = vector.broadcast %c31_i32 : i32 to vector<8x32xi32>
    %600 = arith.cmpi eq, %20, %599 : vector<8x32xi32>
    %cst_100 = arith.constant 0.000000e+00 : f32
    %601 = vector.shape_cast %598 : vector<8x1xf32> to vector<8x1xf32>
    %602 = vector.broadcast %601 : vector<8x1xf32> to vector<8x32xf32>
    %603 = vector.broadcast %cst_100 : f32 to vector<8x32xf32>
    %604 = arith.select %600, %602, %603 : vector<8x32xi1>, vector<8x32xf32>
    %605 = arith.addf %594, %604 : vector<8x32xf32>
    %c0_101 = arith.constant 0 : index
    %c0_102 = arith.constant 0 : index
    %606 = vector.load %arg10[%c0_101, %c0_102] : memref<32x32xf32, #tpu.memory_space<vmem>>, vector<32x32xf32>
    %cst_103 = arith.constant dense<0.000000e+00> : vector<8x32xf32>
    %607 = tpu.matmul %605, %606, %cst_103 {dimension_numbers = #tpu.dot_dimension_numbers<[1], [1], [0], [0], [0, 0, 1, 0], [], []>} : vector<8x32xf32>, vector<32x32xf32>, vector<8x32xf32> -> vector<8x32xf32>
    %c0_104 = arith.constant 0 : index
    %c0_105 = arith.constant 0 : index
    %608 = vector.load %arg11[%c0_104, %c0_105] : memref<1x32xf32, #tpu.memory_space<vmem>>, vector<1x32xf32>
    %609 = vector.broadcast %608 : vector<1x32xf32> to vector<8x32xf32>
    %610 = arith.addf %607, %609 : vector<8x32xf32>
    %c0_106 = arith.constant 0 : index
    %c0_107 = arith.constant 0 : index
    %611 = vector.load %arg12[%c0_106, %c0_107] : memref<8x32xf32, #tpu.memory_space<vmem>>, vector<8x32xf32>
    tpu.vector_store %arg12[%c0_106, %c0_107], %610 {strides = array<i32>} : memref<8x32xf32, #tpu.memory_space<vmem>>, vector<8x32xf32>,
    return
  }
  func.func @transform_0(%arg0: i32) -> (i32, i32) {
    %c0_i32 = arith.constant 0 : i32
    %c0_i32_0 = arith.constant 0 : i32
    %c0_i32_1 = arith.constant 0 : i32
    return %c0_i32, %c0_i32_0 : i32, i32
  }
  func.func @transform_1(%arg0: i32) -> (i32, i32) {
    %c0_i32 = arith.constant 0 : i32
    %c0_i32_0 = arith.constant 0 : i32
    %c0_i32_1 = arith.constant 0 : i32
    return %c0_i32, %c0_i32_0 : i32, i32
  }
  func.func @transform_2(%arg0: i32) -> (i32, i32) {
    %c0_i32 = arith.constant 0 : i32
    %c0_i32_0 = arith.constant 0 : i32
    %c0_i32_1 = arith.constant 0 : i32
    return %c0_i32, %c0_i32_0 : i32, i32
  }
  func.func @transform_3(%arg0: i32) -> (i32, i32) {
    %c0_i32 = arith.constant 0 : i32
    %c0_i32_0 = arith.constant 0 : i32
    %c0_i32_1 = arith.constant 0 : i32
    return %c0_i32, %c0_i32_0 : i32, i32
  }
  func.func @transform_4(%arg0: i32) -> (i32, i32) {
    %c0_i32 = arith.constant 0 : i32
    %c0_i32_0 = arith.constant 0 : i32
    %c0_i32_1 = arith.constant 0 : i32
    return %c0_i32, %c0_i32_0 : i32, i32
  }
  func.func @transform_5(%arg0: i32) -> (i32, i32) {
    %c0_i32 = arith.constant 0 : i32
    %c0_i32_0 = arith.constant 0 : i32
    %c0_i32_1 = arith.constant 0 : i32
    return %c0_i32, %c0_i32_0 : i32, i32
  }
  func.func @transform_6(%arg0: i32) -> (i32, i32) {
    %c0_i32 = arith.constant 0 : i32
    %c0_i32_0 = arith.constant 0 : i32
    %c0_i32_1 = arith.constant 0 : i32
    return %c0_i32, %c0_i32_0 : i32, i32
  }
  func.func @transform_7(%arg0: i32) -> (i32, i32) {
    %c0_i32 = arith.constant 0 : i32
    %c0_i32_0 = arith.constant 0 : i32
    %c0_i32_1 = arith.constant 0 : i32
    return %c0_i32, %c0_i32_0 : i32, i32
  }
  func.func @transform_8(%arg0: i32) -> (i32, i32) {
    %c0_i32 = arith.constant 0 : i32
    %c0_i32_0 = arith.constant 0 : i32
    %c0_i32_1 = arith.constant 0 : i32
    return %c0_i32, %c0_i32_0 : i32, i32
  }
  func.func @transform_9(%arg0: i32) -> (i32, i32) {
    %c0_i32 = arith.constant 0 : i32
    %c0_i32_0 = arith.constant 0 : i32
    %c0_i32_1 = arith.constant 0 : i32
    return %c0_i32, %c0_i32_0 : i32, i32
  }
  func.func @transform_10(%arg0: i32) -> (i32, i32) {
    %c0_i32 = arith.constant 0 : i32
    %c0_i32_0 = arith.constant 0 : i32
    %c0_i32_1 = arith.constant 0 : i32
    return %c0_i32, %c0_i32_0 : i32, i32
  }
  func.func @transform_11(%arg0: i32) -> (i32, i32) {
    %c0_i32 = arith.constant 0 : i32
    %c0_i32_0 = arith.constant 0 : i32
    %c0_i32_1 = arith.constant 0 : i32
    return %c0_i32, %c0_i32_0 : i32, i32
  }
}

</mosaic_0001>

<llo_original>
// kernel: multi_head_attention.1
$region0: #{multi_head_attention.1}
  #allocation0 [shape = 'u32[]', space=smem, size = 0x4, offset = 0x4, fixed_abs, tag = 'smem constant byte address 0x4 - core index']
  #allocation1 [shape = 'u32[144,128]{1,0:T(1,128)}', space=vmem, size = 0x12000, scoped, tag = 'internal scratch']
  %s0 = inlined_call_operand.vmem [shape: f32[8,32], index: 0, kind: input, shape index: {}]
  %s1 = inlined_call_operand.vmem [shape: f32[8,32], index: 1, kind: input, shape index: {}]
  %s2 = inlined_call_operand.hbm [shape: f32[8,32], index: 2, kind: input, shape index: {}]
  %s3 = inlined_call_operand.vmem [shape: f32[32,32], index: 3, kind: input, shape index: {}]
  %s4 = inlined_call_operand.vmem [shape: f32[1,32], index: 4, kind: input, shape index: {}]
  %s5 = inlined_call_operand.hbm [shape: f32[32,32], index: 5, kind: input, shape index: {}]
  %s6 = inlined_call_operand.hbm [shape: f32[1,32], index: 6, kind: input, shape index: {}]
  %s7 = inlined_call_operand.hbm [shape: f32[32,32], index: 7, kind: input, shape index: {}]
  %s8 = inlined_call_operand.hbm [shape: f32[1,32], index: 8, kind: input, shape index: {}]
  %s9 = inlined_call_operand.hbm [shape: f32[32,32], index: 9, kind: input, shape index: {}]
  %s10 = inlined_call_operand.hbm [shape: f32[1,32], index: 10, kind: input, shape index: {}]
  %s11 = inlined_call_operand.hbm [shape: f32[8,32], index: 11, kind: output, shape index: {}]
  %s12 = sld [smem:[#allocation0]]
  $region82: #{multi_head_attention.1} parent=0
    _
  %s14 = ssub.s32 1, %s12
  %s15 = scalar_select 0, %s14, %s12
  $region1: #{multi_head_attention.1} parent=0
    #allocation2 [shape = 'u8[4096]{0}', space=vmem, size = 0x1000, scoped, tag = 'input window, operand 2, single buffered']
    #allocation3 [shape = 's32[1]{0}', space=sflag, size = 0x4, scoped, tag = 'scoped memory for multi_head_attention.1']
    #allocation4 [shape = 's32[1]{0}', space=sflag, size = 0x4, scoped, tag = 'scoped memory for multi_head_attention.1']
    #allocation5 [shape = 'u8[16384]{0}', space=vmem, size = 0x4000, scoped, tag = 'input window, operand 5, single buffered']
    #allocation6 [shape = 's32[1]{0}', space=sflag, size = 0x4, scoped, tag = 'scoped memory for multi_head_attention.1']
    #allocation7 [shape = 'u8[512]{0}', space=vmem, size = 0x400, scoped, tag = 'input window, operand 6, single buffered']
    #allocation8 [shape = 'u8[16384]{0}', space=vmem, size = 0x4000, scoped, tag = 'input window, operand 7, single buffered']
    #allocation9 [shape = 's32[1]{0}', space=sflag, size = 0x4, scoped, tag = 'scoped memory for multi_head_attention.1']
    #allocation10 [shape = 'u8[512]{0}', space=vmem, size = 0x400, scoped, tag = 'input window, operand 8, single buffered']
    #allocation11 [shape = 'u8[16384]{0}', space=vmem, size = 0x4000, scoped, tag = 'input window, operand 9, single buffered']
    #allocation12 [shape = 's32[1]{0}', space=sflag, size = 0x4, scoped, tag = 'scoped memory for multi_head_attention.1']
    #allocation13 [shape = 'u8[512]{0}', space=vmem, size = 0x400, scoped, tag = 'input window, operand 10, single buffered']
    #allocation14 [shape = 'u8[4096]{0}', space=vmem, size = 0x1000, scoped, tag = 'output window, operand 0, single buffered']
    %16 = vsyncpa [#allocation3], 0
    %17 = vsyncpa [#allocation6], 0
    %18 = vsyncpa [#allocation9], 0
    %19 = vsyncpa [#allocation12], 0
    %20 = vsyncpa [#allocation4], 0
    // Predicated region
    $region2: #{multi_head_attention.1} parent=1 // pred_check
      _
    $region3: #{multi_head_attention.1} parent=1 // pred_check_branch
      %22 = sbr.rel (0) target = $region5
    $region4: #{multi_head_attention.1} parent=1 // pred_region
      _
    $region5: #{multi_head_attention.1} parent=1 // pred_fallthru
      _
    // Predicated region
    $region6: #{multi_head_attention.1} parent=1 // pred_check
      _
    $region7: #{multi_head_attention.1} parent=1 // pred_check_branch
      %24 = sbr.rel (0) target = $region9
    $region8: #{multi_head_attention.1} parent=1 // pred_region
      _
    $region9: #{multi_head_attention.1} parent=1 // pred_fallthru
      _
    // Predicated region
    $region10: #{multi_head_attention.1} parent=1 // pred_check
      _
    $region11: #{multi_head_attention.1} parent=1 // pred_check_branch
      %26 = sbr.rel (0) target = $region13
    $region12: #{multi_head_attention.1} parent=1 // pred_region
      %s28 = ssub.s32 128, 128
      %29 = vsyncadd [#allocation3], %s28
      %s31 = sshll.u32 [#allocation2], 4
      %s32 = int_to_ptr.vmem [resolvable:$true] %s31
      %34 = dma.hbm_to_vmem [thread:$0]  %s2, 128, %s32, [#allocation3]
    $region13: #{multi_head_attention.1} parent=1 // pred_fallthru
      _
    // Predicated region
    $region14: #{multi_head_attention.1} parent=1 // pred_check
      _
    $region15: #{multi_head_attention.1} parent=1 // pred_check_branch
      %36 = sbr.rel (0) target = $region17
    $region16: #{multi_head_attention.1} parent=1 // pred_region
      _
    $region17: #{multi_head_attention.1} parent=1 // pred_fallthru
      _
    // Predicated region
    $region18: #{multi_head_attention.1} parent=1 // pred_check
      _
    $region19: #{multi_head_attention.1} parent=1 // pred_check_branch
      %38 = sbr.rel (0) target = $region21
    $region20: #{multi_head_attention.1} parent=1 // pred_region
      _
    $region21: #{multi_head_attention.1} parent=1 // pred_fallthru
      _
    // Predicated region
    $region22: #{multi_head_attention.1} parent=1 // pred_check
      _
    $region23: #{multi_head_attention.1} parent=1 // pred_check_branch
      %40 = sbr.rel (0) target = $region25
    $region24: #{multi_head_attention.1} parent=1 // pred_region
      %s42 = ssub.s32 512, 512
      %43 = vsyncadd [#allocation6], %s42
      %s44 = sshll.u32 [#allocation5], 4
      %s45 = int_to_ptr.vmem [resolvable:$true] %s44
      %50 = dma.hbm_to_vmem [thread:$0]  %s5, 512, %s45, [#allocation6], 128, 128, 8
    $region25: #{multi_head_attention.1} parent=1 // pred_fallthru
      _
    // Predicated region
    $region26: #{multi_head_attention.1} parent=1 // pred_check
      _
    $region27: #{multi_head_attention.1} parent=1 // pred_check_branch
      %52 = sbr.rel (0) target = $region29
    $region28: #{multi_head_attention.1} parent=1 // pred_region
      %s54 = ssub.s32 16, 16
      %55 = vsyncadd [#allocation6], %s54
      %s57 = sshll.u32 [#allocation7], 4
      %s58 = int_to_ptr.vmem [resolvable:$true] %s57
      %60 = dma.hbm_to_vmem [thread:$0]  %s6, 16, %s58, [#allocation6]
    $region29: #{multi_head_attention.1} parent=1 // pred_fallthru
      _
    // Predicated region
    $region30: #{multi_head_attention.1} parent=1 // pred_check
      _
    $region31: #{multi_head_attention.1} parent=1 // pred_check_branch
      %62 = sbr.rel (0) target = $region33
    $region32: #{multi_head_attention.1} parent=1 // pred_region
      %s64 = ssub.s32 512, 512
      %65 = vsyncadd [#allocation9], %s64
      %s66 = sshll.u32 [#allocation8], 4
      %s67 = int_to_ptr.vmem [resolvable:$true] %s66
      %72 = dma.hbm_to_vmem [thread:$0]  %s7, 512, %s67, [#allocation9], 128, 128, 8
    $region33: #{multi_head_attention.1} parent=1 // pred_fallthru
      _
    // Predicated region
    $region34: #{multi_head_attention.1} parent=1 // pred_check
      _
    $region35: #{multi_head_attention.1} parent=1 // pred_check_branch
      %74 = sbr.rel (0) target = $region37
    $region36: #{multi_head_attention.1} parent=1 // pred_region
      %s76 = ssub.s32 16, 16
      %77 = vsyncadd [#allocation9], %s76
      %s79 = sshll.u32 [#allocation10], 4
      %s80 = int_to_ptr.vmem [resolvable:$true] %s79
      %82 = dma.hbm_to_vmem [thread:$0]  %s8, 16, %s80, [#allocation9]
    $region37: #{multi_head_attention.1} parent=1 // pred_fallthru
      _
    // Predicated region
    $region38: #{multi_head_attention.1} parent=1 // pred_check
      _
    $region39: #{multi_head_attention.1} parent=1 // pred_check_branch
      %84 = sbr.rel (0) target = $region41
    $region40: #{multi_head_attention.1} parent=1 // pred_region
      %s86 = ssub.s32 512, 512
      %87 = vsyncadd [#allocation12], %s86
      %s88 = sshll.u32 [#allocation11], 4
      %s89 = int_to_ptr.vmem [resolvable:$true] %s88
      %94 = dma.hbm_to_vmem [thread:$0]  %s9, 512, %s89, [#allocation12], 128, 128, 8
    $region41: #{multi_head_attention.1} parent=1 // pred_fallthru
      _
    // Predicated region
    $region42: #{multi_head_attention.1} parent=1 // pred_check
      _
    $region43: #{multi_head_attention.1} parent=1 // pred_check_branch
      %96 = sbr.rel (0) target = $region45
    $region44: #{multi_head_attention.1} parent=1 // pred_region
      %s98 = ssub.s32 16, 16
      %99 = vsyncadd [#allocation12], %s98
      %s101 = sshll.u32 [#allocation13], 4
      %s102 = int_to_ptr.vmem [resolvable:$true] %s101
      %104 = dma.hbm_to_vmem [thread:$0]  %s10, 16, %s102, [#allocation12]
    $region45: #{multi_head_attention.1} parent=1 // pred_fallthru
      _
    // Predicated region
    $region46: #{multi_head_attention.1} parent=1 // pred_check
      _
    $region47: #{multi_head_attention.1} parent=1 // pred_check_branch
      %106 = sbr.rel (0) target = $region49
    $region48: #{multi_head_attention.1} parent=1 // pred_region
      %107 = dma.done [#allocation3], 128
    $region49: #{multi_head_attention.1} parent=1 // pred_fallthru
      _
    // Predicated region
    $region50: #{multi_head_attention.1} parent=1 // pred_check
      _
    $region51: #{multi_head_attention.1} parent=1 // pred_check_branch
      %109 = sbr.rel (0) target = $region53
    $region52: #{multi_head_attention.1} parent=1 // pred_region
      %110 = dma.done [#allocation6], 512
    $region53: #{multi_head_attention.1} parent=1 // pred_fallthru
      _
    // Predicated region
    $region54: #{multi_head_attention.1} parent=1 // pred_check
      _
    $region55: #{multi_head_attention.1} parent=1 // pred_check_branch
      %112 = sbr.rel (0) target = $region57
    $region56: #{multi_head_attention.1} parent=1 // pred_region
      %113 = dma.done [#allocation6], 16
    $region57: #{multi_head_attention.1} parent=1 // pred_fallthru
      _
    // Predicated region
    $region58: #{multi_head_attention.1} parent=1 // pred_check
      _
    $region59: #{multi_head_attention.1} parent=1 // pred_check_branch
      %115 = sbr.rel (0) target = $region61
    $region60: #{multi_head_attention.1} parent=1 // pred_region
      %116 = dma.done [#allocation9], 512
    $region61: #{multi_head_attention.1} parent=1 // pred_fallthru
      _
    // Predicated region
    $region62: #{multi_head_attention.1} parent=1 // pred_check
      _
    $region63: #{multi_head_attention.1} parent=1 // pred_check_branch
      %118 = sbr.rel (0) target = $region65
    $region64: #{multi_head_attention.1} parent=1 // pred_region
      %119 = dma.done [#allocation9], 16
    $region65: #{multi_head_attention.1} parent=1 // pred_fallthru
      _
    // Predicated region
    $region66: #{multi_head_attention.1} parent=1 // pred_check
      _
    $region67: #{multi_head_attention.1} parent=1 // pred_check_branch
      %121 = sbr.rel (0) target = $region69
    $region68: #{multi_head_attention.1} parent=1 // pred_region
      %122 = dma.done [#allocation12], 512
    $region69: #{multi_head_attention.1} parent=1 // pred_fallthru
      _
    // Predicated region
    $region70: #{multi_head_attention.1} parent=1 // pred_check
      _
    $region71: #{multi_head_attention.1} parent=1 // pred_check_branch
      %124 = sbr.rel (0) target = $region73
    $region72: #{multi_head_attention.1} parent=1 // pred_region
      %125 = dma.done [#allocation12], 16
    $region73: #{multi_head_attention.1} parent=1 // pred_fallthru
      _
    %v126 = vld [vmem:[%s0] sm:$0xff]
    %v127 = vld [vmem:[%s3] sm:$0xff]
    %v128 = vld [vmem:[%s3 + $0x8] sm:$0xff]
    %v129 = vld [vmem:[%s3 + $0x10] sm:$0xff]
    %v130 = vld [vmem:[%s3 + $0x18] sm:$0xff]
    %v131 = vld [vmem:[%s4] sm:$0x1]
    %v133 = vlaneseq
    %v134 = vshrl.u32 %v133, 7
    %v135 = vsub.s32 0, %v134
    %v136 = vrot.slane %v131, %v135
    %vm138 = vcmask 261120
    %v140 = vsel %vm138, %v126, 0
    %v143 = vsel %vm138, %v127, 0
    %v146 = vsel %vm138, %v128, 0
    %v149 = vsel %vm138, %v129, 0
    %v152 = vsel %vm138, %v130, 0
    %154 = vmatprep.subr.mxu0 0.0
    %155 = vmatpush1.xpose.msra.mxu0 %v143
    %156 = vmatprep.subr.mxu0 0.0
    %157 = vmatpush1.xpose.msra.mxu0 %v146
    %158 = vmatprep.subr.mxu0 0.0
    %159 = vmatpush1.xpose.msra.mxu0 %v149
    %160 = vmatprep.subr.mxu0 0.0
    %161 = vmatpush1.xpose.msra.mxu0 %v152
    %162 = vmatprep.subr.mxu0 0.0
    %163 = vmatpush1.xpose.msra.mxu0 0.0
    %164 = vmatprep.subr.mxu0 0.0
    %165 = vmatpush1.xpose.msra.mxu0 0.0
    %166 = vmatprep.subr.mxu0 0.0
    %167 = vmatpush1.xpose.msra.mxu0 0.0
    %168 = vmatprep.subr.mxu0 0.0
    %169 = vmatpush1.xpose.msra.mxu0 0.0
    %170 = vmatprep.subr.mxu0 0.0
    %171 = vmatpush1.xpose.msra.mxu0 0.0
    %172 = vmatprep.subr.mxu0 0.0
    %173 = vmatpush1.xpose.msra.mxu0 0.0
    %174 = vmatprep.subr.mxu0 0.0
    %175 = vmatpush1.xpose.msra.mxu0 0.0
    %176 = vmatprep.subr.mxu0 0.0
    %177 = vmatpush1.xpose.msra.mxu0 0.0
    %178 = vmatprep.subr.mxu0 0.0
    %179 = vmatpush1.xpose.msra.mxu0 0.0
    %180 = vmatprep.subr.mxu0 0.0
    %181 = vmatpush1.xpose.msra.mxu0 0.0
    %182 = vmatprep.subr.mxu0 0.0
    %183 = vmatpush1.xpose.msra.mxu0 0.0
    %184 = vmatprep.subr.mxu0 0.0
    %185 = vmatpush1.xpose.msra.mxu0 0.0
    %186 = vmatprep.subr.mxu0 0.0
    %187 = vmatpush1.xpose.msra.mxu0 0.0
    %188 = vmatprep.subr.mxu0 0.0
    %189 = vmatpush1.xpose.msra.mxu0 0.0
    %190 = vmatprep.subr.mxu0 0.0
    %191 = vmatpush1.xpose.msra.mxu0 0.0
    %192 = vmatprep.subr.mxu0 0.0
    %193 = vmatpush1.xpose.msra.mxu0 0.0
    %194 = vmatprep.subr.mxu0 0.0
    %195 = vmatpush1.xpose.msra.mxu0 0.0
    %196 = vmatprep.subr.mxu0 0.0
    %197 = vmatpush1.xpose.msra.mxu0 0.0
    %198 = vmatprep.subr.mxu0 0.0
    %199 = vmatpush1.xpose.msra.mxu0 0.0
    %200 = vmatprep.subr.mxu0 0.0
    %201 = vmatpush1.xpose.msra.mxu0 0.0
    %202 = vmatprep.subr.mxu0 0.0
    %203 = vmatpush1.xpose.msra.mxu0 0.0
    %204 = vmatprep.subr.mxu0 0.0
    %205 = vmatpush1.xpose.msra.mxu0 0.0
    %206 = vmatprep.subr.mxu0 0.0
    %207 = vmatpush1.xpose.msra.mxu0 0.0
    %208 = vmatprep.subr.mxu0 0.0
    %209 = vmatpush1.xpose.msra.mxu0 0.0
    %210 = vmatprep.subr.mxu0 0.0
    %211 = vmatpush1.xpose.msra.mxu0 0.0
    %212 = vmatprep.subr.mxu0 0.0
    %213 = vmatpush1.xpose.msra.mxu0 0.0
    %214 = vmatprep.subr.mxu0 0.0
    %215 = vmatpush1.xpose.msra.mxu0 0.0
    %216 = vmatprep.subr.mxu0 0.0
    %217 = vmatpush1.xpose.msra.mxu0 0.0
    %218 = vmatprep.mubr.f32.mxu0 0.0
    %219 = vmatmul.mubr.f32.gmra.mrb[0].mxu0 %v140
    %v220 = vpop.f32.mrb[0].mxu0
    %v221 = vadd.f32 %v136, %v220
    %v222 = vpop.f32.mrb[0].mxu0
    %223 = vdwg.mxu0
    %v224 = vld [vmem:[%s1] sm:$0xff]
    %v225 = vld [vmem:[#allocation5] sm:$0xff]
    %v226 = vld [vmem:[#allocation5 + $0x8] sm:$0xff]
    %v227 = vld [vmem:[#allocation5 + $0x10] sm:$0xff]
    %v228 = vld [vmem:[#allocation5 + $0x18] sm:$0xff]
    %v229 = vld [vmem:[#allocation7] sm:$0x1]
    %v231 = vlaneseq
    %v232 = vshrl.u32 %v231, 7
    %v233 = vsub.s32 0, %v232
    %v234 = vrot.slane %v229, %v233
    %v237 = vsel %vm138, %v224, 0
    %v240 = vsel %vm138, %v225, 0
    %v243 = vsel %vm138, %v226, 0
    %v246 = vsel %vm138, %v227, 0
    %v249 = vsel %vm138, %v228, 0
    %251 = vmatprep.subr.mxu0 0.0
    %252 = vmatpush1.xpose.msra.mxu0 %v240
    %253 = vmatprep.subr.mxu0 0.0
    %254 = vmatpush1.xpose.msra.mxu0 %v243
    %255 = vmatprep.subr.mxu0 0.0
    %256 = vmatpush1.xpose.msra.mxu0 %v246
    %257 = vmatprep.subr.mxu0 0.0
    %258 = vmatpush1.xpose.msra.mxu0 %v249
    %259 = vmatprep.subr.mxu0 0.0
    %260 = vmatpush1.xpose.msra.mxu0 0.0
    %261 = vmatprep.subr.mxu0 0.0
    %262 = vmatpush1.xpose.msra.mxu0 0.0
    %263 = vmatprep.subr.mxu0 0.0
    %264 = vmatpush1.xpose.msra.mxu0 0.0
    %265 = vmatprep.subr.mxu0 0.0
    %266 = vmatpush1.xpose.msra.mxu0 0.0
    %267 = vmatprep.subr.mxu0 0.0
    %268 = vmatpush1.xpose.msra.mxu0 0.0
    %269 = vmatprep.subr.mxu0 0.0
    %270 = vmatpush1.xpose.msra.mxu0 0.0
    %271 = vmatprep.subr.mxu0 0.0
    %272 = vmatpush1.xpose.msra.mxu0 0.0
    %273 = vmatprep.subr.mxu0 0.0
    %274 = vmatpush1.xpose.msra.mxu0 0.0
    %275 = vmatprep.subr.mxu0 0.0
    %276 = vmatpush1.xpose.msra.mxu0 0.0
    %277 = vmatprep.subr.mxu0 0.0
    %278 = vmatpush1.xpose.msra.mxu0 0.0
    %279 = vmatprep.subr.mxu0 0.0
    %280 = vmatpush1.xpose.msra.mxu0 0.0
    %281 = vmatprep.subr.mxu0 0.0
    %282 = vmatpush1.xpose.msra.mxu0 0.0
    %283 = vmatprep.subr.mxu0 0.0
    %284 = vmatpush1.xpose.msra.mxu0 0.0
    %285 = vmatprep.subr.mxu0 0.0
    %286 = vmatpush1.xpose.msra.mxu0 0.0
    %287 = vmatprep.subr.mxu0 0.0
    %288 = vmatpush1.xpose.msra.mxu0 0.0
    %289 = vmatprep.subr.mxu0 0.0
    %290 = vmatpush1.xpose.msra.mxu0 0.0
    %291 = vmatprep.subr.mxu0 0.0
    %292 = vmatpush1.xpose.msra.mxu0 0.0
    %293 = vmatprep.subr.mxu0 0.0
    %294 = vmatpush1.xpose.msra.mxu0 0.0
    %295 = vmatprep.subr.mxu0 0.0
    %296 = vmatpush1.xpose.msra.mxu0 0.0
    %297 = vmatprep.subr.mxu0 0.0
    %298 = vmatpush1.xpose.msra.mxu0 0.0
    %299 = vmatprep.subr.mxu0 0.0
    %300 = vmatpush1.xpose.msra.mxu0 0.0
    %301 = vmatprep.subr.mxu0 0.0
    %302 = vmatpush1.xpose.msra.mxu0 0.0
    %303 = vmatprep.subr.mxu0 0.0
    %304 = vmatpush1.xpose.msra.mxu0 0.0
    %305 = vmatprep.subr.mxu0 0.0
    %306 = vmatpush1.xpose.msra.mxu0 0.0
    %307 = vmatprep.subr.mxu0 0.0
    %308 = vmatpush1.xpose.msra.mxu0 0.0
    %309 = vmatprep.subr.mxu0 0.0
    %310 = vmatpush1.xpose.msra.mxu0 0.0
    %311 = vmatprep.subr.mxu0 0.0
    %312 = vmatpush1.xpose.msra.mxu0 0.0
    %313 = vmatprep.subr.mxu0 0.0
    %314 = vmatpush1.xpose.msra.mxu0 0.0
    %315 = vmatprep.mubr.f32.mxu0 0.0
    %316 = vmatmul.mubr.f32.gmra.mrb[0].mxu0 %v237
    %v317 = vpop.f32.mrb[0].mxu0
    %v318 = vadd.f32 %v234, %v317
    %v319 = vpop.f32.mrb[0].mxu0
    %320 = vdwg.mxu0
    %v321 = vld [vmem:[#allocation2] sm:$0xff]
    %v322 = vld [vmem:[#allocation8] sm:$0xff]
    %v323 = vld [vmem:[#allocation8 + $0x8] sm:$0xff]
    %v324 = vld [vmem:[#allocation8 + $0x10] sm:$0xff]
    %v325 = vld [vmem:[#allocation8 + $0x18] sm:$0xff]
    %v326 = vld [vmem:[#allocation10] sm:$0x1]
    %v328 = vlaneseq
    %v329 = vshrl.u32 %v328, 7
    %v330 = vsub.s32 0, %v329
    %v331 = vrot.slane %v326, %v330
    %v334 = vsel %vm138, %v321, 0
    %v337 = vsel %vm138, %v322, 0
    %v340 = vsel %vm138, %v323, 0
    %v343 = vsel %vm138, %v324, 0
    %v346 = vsel %vm138, %v325, 0
    %348 = vmatprep.subr.mxu0 0.0
    %349 = vmatpush1.xpose.msra.mxu0 %v337
    %350 = vmatprep.subr.mxu0 0.0
    %351 = vmatpush1.xpose.msra.mxu0 %v340
    %352 = vmatprep.subr.mxu0 0.0
    %353 = vmatpush1.xpose.msra.mxu0 %v343
    %354 = vmatprep.subr.mxu0 0.0
    %355 = vmatpush1.xpose.msra.mxu0 %v346
    %356 = vmatprep.subr.mxu0 0.0
    %357 = vmatpush1.xpose.msra.mxu0 0.0
    %358 = vmatprep.subr.mxu0 0.0
    %359 = vmatpush1.xpose.msra.mxu0 0.0
    %360 = vmatprep.subr.mxu0 0.0
    %361 = vmatpush1.xpose.msra.mxu0 0.0
    %362 = vmatprep.subr.mxu0 0.0
    %363 = vmatpush1.xpose.msra.mxu0 0.0
    %364 = vmatprep.subr.mxu0 0.0
    %365 = vmatpush1.xpose.msra.mxu0 0.0
    %366 = vmatprep.subr.mxu0 0.0
    %367 = vmatpush1.xpose.msra.mxu0 0.0
    %368 = vmatprep.subr.mxu0 0.0
    %369 = vmatpush1.xpose.msra.mxu0 0.0
    %370 = vmatprep.subr.mxu0 0.0
    %371 = vmatpush1.xpose.msra.mxu0 0.0
    %372 = vmatprep.subr.mxu0 0.0
    %373 = vmatpush1.xpose.msra.mxu0 0.0
    %374 = vmatprep.subr.mxu0 0.0
    %375 = vmatpush1.xpose.msra.mxu0 0.0
    %376 = vmatprep.subr.mxu0 0.0
    %377 = vmatpush1.xpose.msra.mxu0 0.0
    %378 = vmatprep.subr.mxu0 0.0
    %379 = vmatpush1.xpose.msra.mxu0 0.0
    %380 = vmatprep.subr.mxu0 0.0
    %381 = vmatpush1.xpose.msra.mxu0 0.0
    %382 = vmatprep.subr.mxu0 0.0
    %383 = vmatpush1.xpose.msra.mxu0 0.0
    %384 = vmatprep.subr.mxu0 0.0
    %385 = vmatpush1.xpose.msra.mxu0 0.0
    %386 = vmatprep.subr.mxu0 0.0
    %387 = vmatpush1.xpose.msra.mxu0 0.0
    %388 = vmatprep.subr.mxu0 0.0
    %389 = vmatpush1.xpose.msra.mxu0 0.0
    %390 = vmatprep.subr.mxu0 0.0
    %391 = vmatpush1.xpose.msra.mxu0 0.0
    %392 = vmatprep.subr.mxu0 0.0
    %393 = vmatpush1.xpose.msra.mxu0 0.0
    %394 = vmatprep.subr.mxu0 0.0
    %395 = vmatpush1.xpose.msra.mxu0 0.0
    %396 = vmatprep.subr.mxu0 0.0
    %397 = vmatpush1.xpose.msra.mxu0 0.0
    %398 = vmatprep.subr.mxu0 0.0
    %399 = vmatpush1.xpose.msra.mxu0 0.0
    %400 = vmatprep.subr.mxu0 0.0
    %401 = vmatpush1.xpose.msra.mxu0 0.0
    %402 = vmatprep.subr.mxu0 0.0
    %403 = vmatpush1.xpose.msra.mxu0 0.0
    %404 = vmatprep.subr.mxu0 0.0
    %405 = vmatpush1.xpose.msra.mxu0 0.0
    %406 = vmatprep.subr.mxu0 0.0
    %407 = vmatpush1.xpose.msra.mxu0 0.0
    %408 = vmatprep.subr.mxu0 0.0
    %409 = vmatpush1.xpose.msra.mxu0 0.0
    %410 = vmatprep.subr.mxu0 0.0
    %411 = vmatpush1.xpose.msra.mxu0 0.0
    %412 = vmatprep.mubr.f32.mxu0 0.0
    %413 = vmatmul.mubr.f32.gmra.mrb[0].mxu0 %v334
    %v414 = vpop.f32.mrb[0].mxu0
    %v415 = vadd.f32 %v331, %v414
    %v416 = vpop.f32.mrb[0].mxu0
    %417 = vdwg.mxu0
    %v418 = vmul.f32 %v221, 0.5
    %v419 = vlaneseq
    %v420 = vand.u32 %v419, 127
    %422 = vset.pattern.permute.xlu0 0
    %423 = vperm.xlu0 %422, %v418
    %v424 = vpop.permute.xlu0 %423
    %v426 = vmul.f32 %v424, %v318
    %427 = vset.pattern.permute.xlu0 8
    %428 = vperm.xlu0 %427, %v418
    %v429 = vpop.permute.xlu0 %428
    %v431 = vmul.f32 %v429, %v318
    %433 = vrot.lane.b32.xlu0 %v431, 120
    %v434 = vpop.permute.xlu0 %433
    %v436 = vadd.f32 %v426, %v434
    %437 = vset.pattern.permute.xlu0 16
    %438 = vperm.xlu0 %437, %v418
    %v439 = vpop.permute.xlu0 %438
    %v441 = vmul.f32 %v439, %v318
    %443 = vrot.lane.b32.xlu0 %v441, 112
    %v444 = vpop.permute.xlu0 %443
    %v446 = vadd.f32 %v436, %v444
    %447 = vset.pattern.permute.xlu0 24
    %448 = vperm.xlu0 %447, %v418
    %v449 = vpop.permute.xlu0 %448
    %v451 = vmul.f32 %v449, %v318
    %453 = vrot.lane.b32.xlu0 %v451, 104
    %v454 = vpop.permute.xlu0 %453
    %v456 = vadd.f32 %v446, %v454
    %vm457 = vcmask 64512
    %v458 = vsel %vm457, %v456, -inf
    %459 = vmax.xlane.f32.xlu0 %v458
    %v460 = vpop.xlane.xlu0 %459
    %v461 = vsub.f32 %v456, %v460
    %v462 = vmul.f32 %v461, 1.442695
    %v463 = vpow.pop %v462
    %v464 = vsel %vm457, %v463, 0.0
    %465 = vadd.xlane.f32.xlu0 %v464
    %v466 = vpop.xlane.xlu0 %465
    %v467 = vrcp.pop %v466
    %v468 = vmul.f32 %v463, %v467
    %v469 = vmul.f32 %v468, %v415
    %v470 = vsel %vm457, %v469, 0.0
    %471 = vadd.xlane.f32.xlu0 %v470
    %v472 = vpop.xlane.xlu0 %471
    %vm473 = vcmp.eq.s32.totalorder %v420, 0
    %v474 = vsel %vm473, %v472, 0.0
    %v475 = vadd.f32 %v474, 0.0
    %477 = vrot.lane.b32.xlu0 %v415, 120
    %v478 = vpop.permute.xlu0 %477
    %v480 = vmul.f32 %v468, %v478
    %v481 = vsel %vm457, %v480, 0.0
    %482 = vadd.xlane.f32.xlu0 %v481
    %v483 = vpop.xlane.xlu0 %482
    %vm484 = vcmp.eq.s32.totalorder %v420, 8
    %v485 = vsel %vm484, %v483, 0.0
    %v486 = vadd.f32 %v475, %v485
    %487 = vrot.lane.b32.xlu0 %v415, 112
    %v488 = vpop.permute.xlu0 %487
    %v490 = vmul.f32 %v468, %v488
    %v491 = vsel %vm457, %v490, 0.0
    %492 = vadd.xlane.f32.xlu0 %v491
    %v493 = vpop.xlane.xlu0 %492
    %vm494 = vcmp.eq.s32.totalorder %v420, 16
    %v495 = vsel %vm494, %v493, 0.0
    %v496 = vadd.f32 %v486, %v495
    %497 = vrot.lane.b32.xlu0 %v415, 104
    %v498 = vpop.permute.xlu0 %497
    %v500 = vmul.f32 %v468, %v498
    %v501 = vsel %vm457, %v500, 0.0
    %502 = vadd.xlane.f32.xlu0 %v501
    %v503 = vpop.xlane.xlu0 %502
    %vm504 = vcmp.eq.s32.totalorder %v420, 24
    %v505 = vsel %vm504, %v503, 0.0
    %v506 = vadd.f32 %v496, %v505
    %507 = vset.pattern.permute.xlu0 1
    %508 = vperm.xlu0 %507, %v418
    %v509 = vpop.permute.xlu0 %508
    %v511 = vmul.f32 %v509, %v318
    %512 = vset.pattern.permute.xlu0 9
    %513 = vperm.xlu0 %512, %v418
    %v514 = vpop.permute.xlu0 %513
    %v516 = vmul.f32 %v514, %v318
    %518 = vrot.lane.b32.xlu0 %v516, 120
    %v519 = vpop.permute.xlu0 %518
    %v521 = vadd.f32 %v511, %v519
    %522 = vset.pattern.permute.xlu0 17
    %523 = vperm.xlu0 %522, %v418
    %v524 = vpop.permute.xlu0 %523
    %v526 = vmul.f32 %v524, %v318
    %528 = vrot.lane.b32.xlu0 %v526, 112
    %v529 = vpop.permute.xlu0 %528
    %v531 = vadd.f32 %v521, %v529
    %532 = vset.pattern.permute.xlu0 25
    %533 = vperm.xlu0 %532, %v418
    %v534 = vpop.permute.xlu0 %533
    %v536 = vmul.f32 %v534, %v318
    %538 = vrot.lane.b32.xlu0 %v536, 104
    %v539 = vpop.permute.xlu0 %538
    %v541 = vadd.f32 %v531, %v539
    %v542 = vsel %vm457, %v541, -inf
    %543 = vmax.xlane.f32.xlu0 %v542
    %v544 = vpop.xlane.xlu0 %543
    %v545 = vsub.f32 %v541, %v544
    %v546 = vmul.f32 %v545, 1.442695
    %v547 = vpow.pop %v546
    %v548 = vsel %vm457, %v547, 0.0
    %549 = vadd.xlane.f32.xlu0 %v548
    %v550 = vpop.xlane.xlu0 %549
    %v551 = vrcp.pop %v550
    %v552 = vmul.f32 %v547, %v551
    %v553 = vmul.f32 %v552, %v415
    %v554 = vsel %vm457, %v553, 0.0
    %555 = vadd.xlane.f32.xlu0 %v554
    %v556 = vpop.xlane.xlu0 %555
    %vm557 = vcmp.eq.s32.totalorder %v420, 1
    %v558 = vsel %vm557, %v556, 0.0
    %v559 = vadd.f32 %v506, %v558
    %v560 = vmul.f32 %v552, %v478
    %v561 = vsel %vm457, %v560, 0.0
    %562 = vadd.xlane.f32.xlu0 %v561
    %v563 = vpop.xlane.xlu0 %562
    %vm564 = vcmp.eq.s32.totalorder %v420, 9
    %v565 = vsel %vm564, %v563, 0.0
    %v566 = vadd.f32 %v559, %v565
    %v567 = vmul.f32 %v552, %v488
    %v568 = vsel %vm457, %v567, 0.0
    %569 = vadd.xlane.f32.xlu0 %v568
    %v570 = vpop.xlane.xlu0 %569
    %vm571 = vcmp.eq.s32.totalorder %v420, 17
    %v572 = vsel %vm571, %v570, 0.0
    %v573 = vadd.f32 %v566, %v572
    %v574 = vmul.f32 %v552, %v498
    %v575 = vsel %vm457, %v574, 0.0
    %576 = vadd.xlane.f32.xlu0 %v575
    %v577 = vpop.xlane.xlu0 %576
    %vm578 = vcmp.eq.s32.totalorder %v420, 25
    %v579 = vsel %vm578, %v577, 0.0
    %v580 = vadd.f32 %v573, %v579
    %581 = vset.pattern.permute.xlu0 2
    %582 = vperm.xlu0 %581, %v418
    %v583 = vpop.permute.xlu0 %582
    %v585 = vmul.f32 %v583, %v318
    %586 = vset.pattern.permute.xlu0 10
    %587 = vperm.xlu0 %586, %v418
    %v588 = vpop.permute.xlu0 %587
    %v590 = vmul.f32 %v588, %v318
    %592 = vrot.lane.b32.xlu0 %v590, 120
    %v593 = vpop.permute.xlu0 %592
    %v595 = vadd.f32 %v585, %v593
    %596 = vset.pattern.permute.xlu0 18
    %597 = vperm.xlu0 %596, %v418
    %v598 = vpop.permute.xlu0 %597
    %v600 = vmul.f32 %v598, %v318
    %602 = vrot.lane.b32.xlu0 %v600, 112
    %v603 = vpop.permute.xlu0 %602
    %v605 = vadd.f32 %v595, %v603
    %606 = vset.pattern.permute.xlu0 26
    %607 = vperm.xlu0 %606, %v418
    %v608 = vpop.permute.xlu0 %607
    %v610 = vmul.f32 %v608, %v318
    %612 = vrot.lane.b32.xlu0 %v610, 104
    %v613 = vpop.permute.xlu0 %612
    %v615 = vadd.f32 %v605, %v613
    %v616 = vsel %vm457, %v615, -inf
    %617 = vmax.xlane.f32.xlu0 %v616
    %v618 = vpop.xlane.xlu0 %617
    %v619 = vsub.f32 %v615, %v618
    %v620 = vmul.f32 %v619, 1.442695
    %v621 = vpow.pop %v620
    %v622 = vsel %vm457, %v621, 0.0
    %623 = vadd.xlane.f32.xlu0 %v622
    %v624 = vpop.xlane.xlu0 %623
    %v625 = vrcp.pop %v624
    %v626 = vmul.f32 %v621, %v625
    %v627 = vmul.f32 %v626, %v415
    %v628 = vsel %vm457, %v627, 0.0
    %629 = vadd.xlane.f32.xlu0 %v628
    %v630 = vpop.xlane.xlu0 %629
    %vm631 = vcmp.eq.s32.totalorder %v420, 2
    %v632 = vsel %vm631, %v630, 0.0
    %v633 = vadd.f32 %v580, %v632
    %v634 = vmul.f32 %v626, %v478
    %v635 = vsel %vm457, %v634, 0.0
    %636 = vadd.xlane.f32.xlu0 %v635
    %v637 = vpop.xlane.xlu0 %636
    %vm638 = vcmp.eq.s32.totalorder %v420, 10
    %v639 = vsel %vm638, %v637, 0.0
    %v640 = vadd.f32 %v633, %v639
    %v641 = vmul.f32 %v626, %v488
    %v642 = vsel %vm457, %v641, 0.0
    %643 = vadd.xlane.f32.xlu0 %v642
    %v644 = vpop.xlane.xlu0 %643
    %vm645 = vcmp.eq.s32.totalorder %v420, 18
    %v646 = vsel %vm645, %v644, 0.0
    %v647 = vadd.f32 %v640, %v646
    %v648 = vmul.f32 %v626, %v498
    %v649 = vsel %vm457, %v648, 0.0
    %650 = vadd.xlane.f32.xlu0 %v649
    %v651 = vpop.xlane.xlu0 %650
    %vm652 = vcmp.eq.s32.totalorder %v420, 26
    %v653 = vsel %vm652, %v651, 0.0
    %v654 = vadd.f32 %v647, %v653
    %655 = vset.pattern.permute.xlu0 3
    %656 = vperm.xlu0 %655, %v418
    %v657 = vpop.permute.xlu0 %656
    %v659 = vmul.f32 %v657, %v318
    %660 = vset.pattern.permute.xlu0 11
    %661 = vperm.xlu0 %660, %v418
    %v662 = vpop.permute.xlu0 %661
    %v664 = vmul.f32 %v662, %v318
    %666 = vrot.lane.b32.xlu0 %v664, 120
    %v667 = vpop.permute.xlu0 %666
    %v669 = vadd.f32 %v659, %v667
    %670 = vset.pattern.permute.xlu0 19
    %671 = vperm.xlu0 %670, %v418
    %v672 = vpop.permute.xlu0 %671
    %v674 = vmul.f32 %v672, %v318
    %676 = vrot.lane.b32.xlu0 %v674, 112
    %v677 = vpop.permute.xlu0 %676
    %v679 = vadd.f32 %v669, %v677
    %680 = vset.pattern.permute.xlu0 27
    %681 = vperm.xlu0 %680, %v418
    %v682 = vpop.permute.xlu0 %681
    %v684 = vmul.f32 %v682, %v318
    %686 = vrot.lane.b32.xlu0 %v684, 104
    %v687 = vpop.permute.xlu0 %686
    %v689 = vadd.f32 %v679, %v687
    %v690 = vsel %vm457, %v689, -inf
    %691 = vmax.xlane.f32.xlu0 %v690
    %v692 = vpop.xlane.xlu0 %691
    %v693 = vsub.f32 %v689, %v692
    %v694 = vmul.f32 %v693, 1.442695
    %v695 = vpow.pop %v694
    %v696 = vsel %vm457, %v695, 0.0
    %697 = vadd.xlane.f32.xlu0 %v696
    %v698 = vpop.xlane.xlu0 %697
    %v699 = vrcp.pop %v698
    %v700 = vmul.f32 %v695, %v699
    %v701 = vmul.f32 %v700, %v415
    %v702 = vsel %vm457, %v701, 0.0
    %703 = vadd.xlane.f32.xlu0 %v702
    %v704 = vpop.xlane.xlu0 %703
    %vm705 = vcmp.eq.s32.totalorder %v420, 3
    %v706 = vsel %vm705, %v704, 0.0
    %v707 = vadd.f32 %v654, %v706
    %v708 = vmul.f32 %v700, %v478
    %v709 = vsel %vm457, %v708, 0.0
    %710 = vadd.xlane.f32.xlu0 %v709
    %v711 = vpop.xlane.xlu0 %710
    %vm712 = vcmp.eq.s32.totalorder %v420, 11
    %v713 = vsel %vm712, %v711, 0.0
    %v714 = vadd.f32 %v707, %v713
    %v715 = vmul.f32 %v700, %v488
    %v716 = vsel %vm457, %v715, 0.0
    %717 = vadd.xlane.f32.xlu0 %v716
    %v718 = vpop.xlane.xlu0 %717
    %vm719 = vcmp.eq.s32.totalorder %v420, 19
    %v720 = vsel %vm719, %v718, 0.0
    %v721 = vadd.f32 %v714, %v720
    %v722 = vmul.f32 %v700, %v498
    %v723 = vsel %vm457, %v722, 0.0
    %724 = vadd.xlane.f32.xlu0 %v723
    %v725 = vpop.xlane.xlu0 %724
    %vm726 = vcmp.eq.s32.totalorder %v420, 27
    %v727 = vsel %vm726, %v725, 0.0
    %v728 = vadd.f32 %v721, %v727
    %729 = vset.pattern.permute.xlu0 4
    %730 = vperm.xlu0 %729, %v418
    %v731 = vpop.permute.xlu0 %730
    %v733 = vmul.f32 %v731, %v318
    %734 = vset.pattern.permute.xlu0 12
    %735 = vperm.xlu0 %734, %v418
    %v736 = vpop.permute.xlu0 %735
    %v738 = vmul.f32 %v736, %v318
    %740 = vrot.lane.b32.xlu0 %v738, 120
    %v741 = vpop.permute.xlu0 %740
    %v743 = vadd.f32 %v733, %v741
    %744 = vset.pattern.permute.xlu0 20
    %745 = vperm.xlu0 %744, %v418
    %v746 = vpop.permute.xlu0 %745
    %v748 = vmul.f32 %v746, %v318
    %750 = vrot.lane.b32.xlu0 %v748, 112
    %v751 = vpop.permute.xlu0 %750
    %v753 = vadd.f32 %v743, %v751
    %754 = vset.pattern.permute.xlu0 28
    %755 = vperm.xlu0 %754, %v418
    %v756 = vpop.permute.xlu0 %755
    %v758 = vmul.f32 %v756, %v318
    %760 = vrot.lane.b32.xlu0 %v758, 104
    %v761 = vpop.permute.xlu0 %760
    %v763 = vadd.f32 %v753, %v761
    %v764 = vsel %vm457, %v763, -inf
    %765 = vmax.xlane.f32.xlu0 %v764
    %v766 = vpop.xlane.xlu0 %765
    %v767 = vsub.f32 %v763, %v766
    %v768 = vmul.f32 %v767, 1.442695
    %v769 = vpow.pop %v768
    %v770 = vsel %vm457, %v769, 0.0
    %771 = vadd.xlane.f32.xlu0 %v770
    %v772 = vpop.xlane.xlu0 %771
    %v773 = vrcp.pop %v772
    %v774 = vmul.f32 %v769, %v773
    %v775 = vmul.f32 %v774, %v415
    %v776 = vsel %vm457, %v775, 0.0
    %777 = vadd.xlane.f32.xlu0 %v776
    %v778 = vpop.xlane.xlu0 %777
    %vm779 = vcmp.eq.s32.totalorder %v420, 4
    %v780 = vsel %vm779, %v778, 0.0
    %v781 = vadd.f32 %v728, %v780
    %v782 = vmul.f32 %v774, %v478
    %v783 = vsel %vm457, %v782, 0.0
    %784 = vadd.xlane.f32.xlu0 %v783
    %v785 = vpop.xlane.xlu0 %784
    %vm786 = vcmp.eq.s32.totalorder %v420, 12
    %v787 = vsel %vm786, %v785, 0.0
    %v788 = vadd.f32 %v781, %v787
    %v789 = vmul.f32 %v774, %v488
    %v790 = vsel %vm457, %v789, 0.0
    %791 = vadd.xlane.f32.xlu0 %v790
    %v792 = vpop.xlane.xlu0 %791
    %vm793 = vcmp.eq.s32.totalorder %v420, 20
    %v794 = vsel %vm793, %v792, 0.0
    %v795 = vadd.f32 %v788, %v794
    %v796 = vmul.f32 %v774, %v498
    %v797 = vsel %vm457, %v796, 0.0
    %798 = vadd.xlane.f32.xlu0 %v797
    %v799 = vpop.xlane.xlu0 %798
    %vm800 = vcmp.eq.s32.totalorder %v420, 28
    %v801 = vsel %vm800, %v799, 0.0
    %v802 = vadd.f32 %v795, %v801
    %803 = vset.pattern.permute.xlu0 5
    %804 = vperm.xlu0 %803, %v418
    %v805 = vpop.permute.xlu0 %804
    %v807 = vmul.f32 %v805, %v318
    %808 = vset.pattern.permute.xlu0 13
    %809 = vperm.xlu0 %808, %v418
    %v810 = vpop.permute.xlu0 %809
    %v812 = vmul.f32 %v810, %v318
    %814 = vrot.lane.b32.xlu0 %v812, 120
    %v815 = vpop.permute.xlu0 %814
    %v817 = vadd.f32 %v807, %v815
    %818 = vset.pattern.permute.xlu0 21
    %819 = vperm.xlu0 %818, %v418
    %v820 = vpop.permute.xlu0 %819
    %v822 = vmul.f32 %v820, %v318
    %824 = vrot.lane.b32.xlu0 %v822, 112
    %v825 = vpop.permute.xlu0 %824
    %v827 = vadd.f32 %v817, %v825
    %828 = vset.pattern.permute.xlu0 29
    %829 = vperm.xlu0 %828, %v418
    %v830 = vpop.permute.xlu0 %829
    %v832 = vmul.f32 %v830, %v318
    %834 = vrot.lane.b32.xlu0 %v832, 104
    %v835 = vpop.permute.xlu0 %834
    %v837 = vadd.f32 %v827, %v835
    %v838 = vsel %vm457, %v837, -inf
    %839 = vmax.xlane.f32.xlu0 %v838
    %v840 = vpop.xlane.xlu0 %839
    %v841 = vsub.f32 %v837, %v840
    %v842 = vmul.f32 %v841, 1.442695
    %v843 = vpow.pop %v842
    %v844 = vsel %vm457, %v843, 0.0
    %845 = vadd.xlane.f32.xlu0 %v844
    %v846 = vpop.xlane.xlu0 %845
    %v847 = vrcp.pop %v846
    %v848 = vmul.f32 %v843, %v847
    %v849 = vmul.f32 %v848, %v415
    %v850 = vsel %vm457, %v849, 0.0
    %851 = vadd.xlane.f32.xlu0 %v850
    %v852 = vpop.xlane.xlu0 %851
    %vm853 = vcmp.eq.s32.totalorder %v420, 5
    %v854 = vsel %vm853, %v852, 0.0
    %v855 = vadd.f32 %v802, %v854
    %v856 = vmul.f32 %v848, %v478
    %v857 = vsel %vm457, %v856, 0.0
    %858 = vadd.xlane.f32.xlu0 %v857
    %v859 = vpop.xlane.xlu0 %858
    %vm860 = vcmp.eq.s32.totalorder %v420, 13
    %v861 = vsel %vm860, %v859, 0.0
    %v862 = vadd.f32 %v855, %v861
    %v863 = vmul.f32 %v848, %v488
    %v864 = vsel %vm457, %v863, 0.0
    %865 = vadd.xlane.f32.xlu0 %v864
    %v866 = vpop.xlane.xlu0 %865
    %vm867 = vcmp.eq.s32.totalorder %v420, 21
    %v868 = vsel %vm867, %v866, 0.0
    %v869 = vadd.f32 %v862, %v868
    %v870 = vmul.f32 %v848, %v498
    %v871 = vsel %vm457, %v870, 0.0
    %872 = vadd.xlane.f32.xlu0 %v871
    %v873 = vpop.xlane.xlu0 %872
    %vm874 = vcmp.eq.s32.totalorder %v420, 29
    %v875 = vsel %vm874, %v873, 0.0
    %v876 = vadd.f32 %v869, %v875
    %877 = vset.pattern.permute.xlu0 6
    %878 = vperm.xlu0 %877, %v418
    %v879 = vpop.permute.xlu0 %878
    %v881 = vmul.f32 %v879, %v318
    %882 = vset.pattern.permute.xlu0 14
    %883 = vperm.xlu0 %882, %v418
    %v884 = vpop.permute.xlu0 %883
    %v886 = vmul.f32 %v884, %v318
    %888 = vrot.lane.b32.xlu0 %v886, 120
    %v889 = vpop.permute.xlu0 %888
    %v891 = vadd.f32 %v881, %v889
    %892 = vset.pattern.permute.xlu0 22
    %893 = vperm.xlu0 %892, %v418
    %v894 = vpop.permute.xlu0 %893
    %v896 = vmul.f32 %v894, %v318
    %898 = vrot.lane.b32.xlu0 %v896, 112
    %v899 = vpop.permute.xlu0 %898
    %v901 = vadd.f32 %v891, %v899
    %902 = vset.pattern.permute.xlu0 30
    %903 = vperm.xlu0 %902, %v418
    %v904 = vpop.permute.xlu0 %903
    %v906 = vmul.f32 %v904, %v318
    %908 = vrot.lane.b32.xlu0 %v906, 104
    %v909 = vpop.permute.xlu0 %908
    %v911 = vadd.f32 %v901, %v909
    %v912 = vsel %vm457, %v911, -inf
    %913 = vmax.xlane.f32.xlu0 %v912
    %v914 = vpop.xlane.xlu0 %913
    %v915 = vsub.f32 %v911, %v914
    %v916 = vmul.f32 %v915, 1.442695
    %v917 = vpow.pop %v916
    %v918 = vsel %vm457, %v917, 0.0
    %919 = vadd.xlane.f32.xlu0 %v918
    %v920 = vpop.xlane.xlu0 %919
    %v921 = vrcp.pop %v920
    %v922 = vmul.f32 %v917, %v921
    %v923 = vmul.f32 %v922, %v415
    %v924 = vsel %vm457, %v923, 0.0
    %925 = vadd.xlane.f32.xlu0 %v924
    %v926 = vpop.xlane.xlu0 %925
    %vm927 = vcmp.eq.s32.totalorder %v420, 6
    %v928 = vsel %vm927, %v926, 0.0
    %v929 = vadd.f32 %v876, %v928
    %v930 = vmul.f32 %v922, %v478
    %v931 = vsel %vm457, %v930, 0.0
    %932 = vadd.xlane.f32.xlu0 %v931
    %v933 = vpop.xlane.xlu0 %932
    %vm934 = vcmp.eq.s32.totalorder %v420, 14
    %v935 = vsel %vm934, %v933, 0.0
    %v936 = vadd.f32 %v929, %v935
    %v937 = vmul.f32 %v922, %v488
    %v938 = vsel %vm457, %v937, 0.0
    %939 = vadd.xlane.f32.xlu0 %v938
    %v940 = vpop.xlane.xlu0 %939
    %vm941 = vcmp.eq.s32.totalorder %v420, 22
    %v942 = vsel %vm941, %v940, 0.0
    %v943 = vadd.f32 %v936, %v942
    %v944 = vmul.f32 %v922, %v498
    %v945 = vsel %vm457, %v944, 0.0
    %946 = vadd.xlane.f32.xlu0 %v945
    %v947 = vpop.xlane.xlu0 %946
    %vm948 = vcmp.eq.s32.totalorder %v420, 30
    %v949 = vsel %vm948, %v947, 0.0
    %v950 = vadd.f32 %v943, %v949
    %951 = vset.pattern.permute.xlu0 7
    %952 = vperm.xlu0 %951, %v418
    %v953 = vpop.permute.xlu0 %952
    %v955 = vmul.f32 %v953, %v318
    %956 = vset.pattern.permute.xlu0 15
    %957 = vperm.xlu0 %956, %v418
    %v958 = vpop.permute.xlu0 %957
    %v960 = vmul.f32 %v958, %v318
    %962 = vrot.lane.b32.xlu0 %v960, 120
    %v963 = vpop.permute.xlu0 %962
    %v965 = vadd.f32 %v955, %v963
    %966 = vset.pattern.permute.xlu0 23
    %967 = vperm.xlu0 %966, %v418
    %v968 = vpop.permute.xlu0 %967
    %v970 = vmul.f32 %v968, %v318
    %972 = vrot.lane.b32.xlu0 %v970, 112
    %v973 = vpop.permute.xlu0 %972
    %v975 = vadd.f32 %v965, %v973
    %976 = vset.pattern.permute.xlu0 31
    %977 = vperm.xlu0 %976, %v418
    %v978 = vpop.permute.xlu0 %977
    %v980 = vmul.f32 %v978, %v318
    %982 = vrot.lane.b32.xlu0 %v980, 104
    %v983 = vpop.permute.xlu0 %982
    %v985 = vadd.f32 %v975, %v983
    %v986 = vsel %vm457, %v985, -inf
    %987 = vmax.xlane.f32.xlu0 %v986
    %v988 = vpop.xlane.xlu0 %987
    %v989 = vsub.f32 %v985, %v988
    %v990 = vmul.f32 %v989, 1.442695
    %v991 = vpow.pop %v990
    %v992 = vsel %vm457, %v991, 0.0
    %993 = vadd.xlane.f32.xlu0 %v992
    %v994 = vpop.xlane.xlu0 %993
    %v995 = vrcp.pop %v994
    %v996 = vmul.f32 %v991, %v995
    %v997 = vmul.f32 %v996, %v415
    %v998 = vsel %vm457, %v997, 0.0
    %999 = vadd.xlane.f32.xlu0 %v998
    %v1000 = vpop.xlane.xlu0 %999
    %vm1001 = vcmp.eq.s32.totalorder %v420, 7
    %v1002 = vsel %vm1001, %v1000, 0.0
    %v1003 = vadd.f32 %v950, %v1002
    %v1004 = vmul.f32 %v996, %v478
    %v1005 = vsel %vm457, %v1004, 0.0
    %1006 = vadd.xlane.f32.xlu0 %v1005
    %v1007 = vpop.xlane.xlu0 %1006
    %vm1008 = vcmp.eq.s32.totalorder %v420, 15
    %v1009 = vsel %vm1008, %v1007, 0.0
    %v1010 = vadd.f32 %v1003, %v1009
    %v1011 = vmul.f32 %v996, %v488
    %v1012 = vsel %vm457, %v1011, 0.0
    %1013 = vadd.xlane.f32.xlu0 %v1012
    %v1014 = vpop.xlane.xlu0 %1013
    %vm1015 = vcmp.eq.s32.totalorder %v420, 23
    %v1016 = vsel %vm1015, %v1014, 0.0
    %v1017 = vadd.f32 %v1010, %v1016
    %v1018 = vmul.f32 %v996, %v498
    %v1019 = vsel %vm457, %v1018, 0.0
    %1020 = vadd.xlane.f32.xlu0 %v1019
    %v1021 = vpop.xlane.xlu0 %1020
    %vm1022 = vcmp.eq.s32.totalorder %v420, 31
    %v1023 = vsel %vm1022, %v1021, 0.0
    %v1024 = vadd.f32 %v1017, %v1023
    %v1025 = vld [vmem:[#allocation11] sm:$0xff]
    %v1026 = vld [vmem:[#allocation11 + $0x8] sm:$0xff]
    %v1027 = vld [vmem:[#allocation11 + $0x10] sm:$0xff]
    %v1028 = vld [vmem:[#allocation11 + $0x18] sm:$0xff]
    %v1029 = vld [vmem:[#allocation13] sm:$0x1]
    %v1031 = vlaneseq
    %v1032 = vshrl.u32 %v1031, 7
    %v1033 = vsub.s32 0, %v1032
    %v1034 = vrot.slane %v1029, %v1033
    %v1037 = vsel %vm138, %v1024, 0
    %v1040 = vsel %vm138, %v1025, 0
    %v1043 = vsel %vm138, %v1026, 0
    %v1046 = vsel %vm138, %v1027, 0
    %v1049 = vsel %vm138, %v1028, 0
    %1051 = vmatprep.subr.mxu0 0.0
    %1052 = vmatpush1.xpose.msra.mxu0 %v1040
    %1053 = vmatprep.subr.mxu0 0.0
    %1054 = vmatpush1.xpose.msra.mxu0 %v1043
    %1055 = vmatprep.subr.mxu0 0.0
    %1056 = vmatpush1.xpose.msra.mxu0 %v1046
    %1057 = vmatprep.subr.mxu0 0.0
    %1058 = vmatpush1.xpose.msra.mxu0 %v1049
    %1059 = vmatprep.subr.mxu0 0.0
    %1060 = vmatpush1.xpose.msra.mxu0 0.0
    %1061 = vmatprep.subr.mxu0 0.0
    %1062 = vmatpush1.xpose.msra.mxu0 0.0
    %1063 = vmatprep.subr.mxu0 0.0
    %1064 = vmatpush1.xpose.msra.mxu0 0.0
    %1065 = vmatprep.subr.mxu0 0.0
    %1066 = vmatpush1.xpose.msra.mxu0 0.0
    %1067 = vmatprep.subr.mxu0 0.0
    %1068 = vmatpush1.xpose.msra.mxu0 0.0
    %1069 = vmatprep.subr.mxu0 0.0
    %1070 = vmatpush1.xpose.msra.mxu0 0.0
    %1071 = vmatprep.subr.mxu0 0.0
    %1072 = vmatpush1.xpose.msra.mxu0 0.0
    %1073 = vmatprep.subr.mxu0 0.0
    %1074 = vmatpush1.xpose.msra.mxu0 0.0
    %1075 = vmatprep.subr.mxu0 0.0
    %1076 = vmatpush1.xpose.msra.mxu0 0.0
    %1077 = vmatprep.subr.mxu0 0.0
    %1078 = vmatpush1.xpose.msra.mxu0 0.0
    %1079 = vmatprep.subr.mxu0 0.0
    %1080 = vmatpush1.xpose.msra.mxu0 0.0
    %1081 = vmatprep.subr.mxu0 0.0
    %1082 = vmatpush1.xpose.msra.mxu0 0.0
    %1083 = vmatprep.subr.mxu0 0.0
    %1084 = vmatpush1.xpose.msra.mxu0 0.0
    %1085 = vmatprep.subr.mxu0 0.0
    %1086 = vmatpush1.xpose.msra.mxu0 0.0
    %1087 = vmatprep.subr.mxu0 0.0
    %1088 = vmatpush1.xpose.msra.mxu0 0.0
    %1089 = vmatprep.subr.mxu0 0.0
    %1090 = vmatpush1.xpose.msra.mxu0 0.0
    %1091 = vmatprep.subr.mxu0 0.0
    %1092 = vmatpush1.xpose.msra.mxu0 0.0
    %1093 = vmatprep.subr.mxu0 0.0
    %1094 = vmatpush1.xpose.msra.mxu0 0.0
    %1095 = vmatprep.subr.mxu0 0.0
    %1096 = vmatpush1.xpose.msra.mxu0 0.0
    %1097 = vmatprep.subr.mxu0 0.0
    %1098 = vmatpush1.xpose.msra.mxu0 0.0
    %1099 = vmatprep.subr.mxu0 0.0
    %1100 = vmatpush1.xpose.msra.mxu0 0.0
    %1101 = vmatprep.subr.mxu0 0.0
    %1102 = vmatpush1.xpose.msra.mxu0 0.0
    %1103 = vmatprep.subr.mxu0 0.0
    %1104 = vmatpush1.xpose.msra.mxu0 0.0
    %1105 = vmatprep.subr.mxu0 0.0
    %1106 = vmatpush1.xpose.msra.mxu0 0.0
    %1107 = vmatprep.subr.mxu0 0.0
    %1108 = vmatpush1.xpose.msra.mxu0 0.0
    %1109 = vmatprep.subr.mxu0 0.0
    %1110 = vmatpush1.xpose.msra.mxu0 0.0
    %1111 = vmatprep.subr.mxu0 0.0
    %1112 = vmatpush1.xpose.msra.mxu0 0.0
    %1113 = vmatprep.subr.mxu0 0.0
    %1114 = vmatpush1.xpose.msra.mxu0 0.0
    %1115 = vmatprep.mubr.f32.mxu0 0.0
    %1116 = vmatmul.mubr.f32.gmra.mrb[0].mxu0 %v1037
    %v1117 = vpop.f32.mrb[0].mxu0
    %v1118 = vadd.f32 %v1034, %v1117
    %v1119 = vpop.f32.mrb[0].mxu0
    %1120 = vdwg.mxu0
    %1121 = vst.msk [vmem:[#allocation14] sm:$0xff] %vm138, %v1118
    // Predicated region
    $region74: #{multi_head_attention.1} parent=1 // pred_check
      _
    $region75: #{multi_head_attention.1} parent=1 // pred_check_branch
      %1123 = sbr.rel (0) target = $region77
    $region76: #{multi_head_attention.1} parent=1 // pred_region
      %s1125 = ssub.s32 128, 128
      %1126 = vsyncadd [#allocation4], %s1125
      %s1128 = sshll.u32 [#allocation14], 4
      %s1129 = int_to_ptr.vmem [resolvable:$true] %s1128
      %1131 = dma.vmem_to_hbm [thread:$0]  %s1129, 128, %s11, [#allocation4]
    $region77: #{multi_head_attention.1} parent=1 // pred_fallthru
      _
    // Predicated region
    $region78: #{multi_head_attention.1} parent=1 // pred_check
      _
    $region79: #{multi_head_attention.1} parent=1 // pred_check_branch
      %1133 = sbr.rel (0) target = $region81
    $region80: #{multi_head_attention.1} parent=1 // pred_region
      %1134 = dma.done [#allocation4], 128
    $region81: #{multi_head_attention.1} parent=1 // pred_fallthru
      _
    %1135 = vsyncpa [#allocation3], 1
    %1136 = vsyncpa [#allocation6], 1
    %1137 = vsyncpa [#allocation9], 1
    %1138 = vsyncpa [#allocation12], 1
    %1139 = vsyncpa [#allocation4], 1

</llo_original>
